<compile_context>
chip_gen: v7x
topology: tpu7x:2x2x1
jax: 0.10.0
libtpu: 0.0.40
codegen_flags: <defaults>
</compile_context>

<pallas_src>
import functools
import math

import jax
import jax.numpy as jnp
from jax import lax
from jax.experimental import pallas as pl
from jax.experimental.pallas import tpu as pltpu

NEG_SLOPE = 0.01   # nn.LeakyReLU() default
BN_EPS = 1e-5      # nn.BatchNorm2d default
LANE = 128         # TPU lane width
TM_ROWS = 1024     # target conv-output rows (M) per grid step (review: 512-2048)


def _round_up(x, m):
    return (x + m - 1) // m * m


def _vmem_limit_bytes(est_bytes):
    """Scoped-VMEM request derived from the tile footprint, capped below physical VMEM."""
    try:
        cap = int(0.85 * pltpu.get_tpu_info().vmem_capacity_bytes)   # ~54 MiB on v7x
    except Exception:                                                 # conservative fallback
        cap = 48 << 20
    return int(min(max(est_bytes + (4 << 20), 16 << 20), cap))


# -------- pass 1: conv tile (bf16 MXU, f32 acc) -> per-tile partial per-channel stats --------
def _stats_kernel(x_ref, w_ref, sum_ref, sq_ref, *, build_patches, keep_valid):
    p = build_patches(x_ref)                                        # [TM, Kp] bf16
    conv = jnp.dot(p, w_ref[...], preferred_element_type=jnp.float32)
    conv = keep_valid(conv)                                         # zero rows past H_out (if any)
    sum_ref[0] = jnp.sum(conv, axis=0, keepdims=True)
    sq_ref[0] = jnp.sum(conv * conv, axis=0, keepdims=True)


# -------- pass 2: recompute conv tile, fused BN affine + LeakyReLU, unpadded-channel store --------
def _norm_kernel(x_ref, w_ref, scale_ref, shift_ref, o_ref, *, build_patches):
    p = build_patches(x_ref)
    conv = jnp.dot(p, w_ref[...], preferred_element_type=jnp.float32)
    y = conv * scale_ref[...] + shift_ref[...]
    y = jnp.where(y >= 0, y, NEG_SLOPE * y)
    o_ref[...] = y[:, :o_ref.shape[-1]].astype(o_ref.dtype)


@functools.partial(jax.jit, static_argnames=("stride", "tm_rows"))
def conv_bn_relu(x_nchw, weight, bias, gamma, beta, stride=1, tm_rows=TM_ROWS):
    """Forward of ConvBNReLU. x_nchw: [N, C_in, H, W]; weight: [C_out, C_in, 3, 3]."""
    del bias  # exactly cancelled by the training-mode BN mean subtraction
    N, C_in, H, W = x_nchw.shape
    C_out = weight.shape[0]
    H_out = (H - 1) // stride + 1            # padding=1, kernel=3
    W_out = (W - 1) // stride + 1
    M = N * H_out * W_out
    K = 9 * C_in
    Kp = _round_up(K, LANE)                  # MXU-aligned contraction (zero-filled in-kernel)
    Cp = _round_up(C_out, LANE)              # matmul / stat lane dim (store stays unpadded)

    # weight [C_out, C_in, 3, 3] -> [Kp, Cp] bf16 with k-order (kh, kw, c_in)
    w2 = jnp.transpose(weight, (2, 3, 1, 0)).reshape(K, C_out)
    w2 = jnp.pad(w2, ((0, Kp - K), (0, Cp - C_out))).astype(jnp.bfloat16)

    # NHWC + bf16 BEFORE any spatial glue, so every intermediate is half-width.
    x = jnp.transpose(x_nchw, (0, 2, 3, 1)).astype(jnp.bfloat16)

    if stride == 1:
        # ---- fused path: build the 3x3 taps in-kernel from a padded row slab (no HBM im2col) ----
        tr = max(1, min(H_out, tm_rows // W_out))
        tr = _round_up(tr, 8 // math.gcd(W_out, 8))      # keep TM = tr*W_out 8-row aligned
        T = (H_out + tr - 1) // tr
        TM = tr * W_out
        G = N * T
        RS = tr + 2                                      # slab rows incl. the 3x3 halo
        W2 = W + 2
        rows_total = max(H + 2, T * tr + 2)
        xp = jnp.pad(x, ((0, 0), (1, rows_total - H - 1), (1, 1), (0, 0)))
        # per-row-tile slabs with a duplicated 2-row halo (<= (tr+2)/tr extra bytes)
        slabs = jnp.stack([xp[:, t * tr: t * tr + RS] for t in range(T)], axis=1)
        x_in = slabs.reshape(G, RS, W2, C_in)

        grid = (N, T)
        x_spec = pl.BlockSpec((1, RS, W2, C_in), lambda n, t: (n * T + t, 0, 0, 0))
        row_block = lambda n, t: n * T + t

        def build_patches(x_ref):
            slab = x_ref[0]                              # [RS, W+2, C_in] bf16
            taps = [slab[kh:kh + tr, kw:kw + W_out, :]
                    for kh in range(3) for kw in range(3)]
            if Kp > K:
                taps.append(jnp.zeros((tr, W_out, Kp - K), slab.dtype))
            return jnp.concatenate(taps, axis=-1).reshape(TM, Kp)

        if T * tr != H_out:                              # only the last row tile is partial
            def keep_valid(conv):
                nvalid = jnp.minimum(tr, H_out - pl.program_id(1) * tr) * W_out
                rows = lax.broadcasted_iota(jnp.int32, (TM, 1), 0)
                return jnp.where(rows < nvalid, conv, 0.0)
        else:
            keep_valid = lambda conv: conv

        flat_rows = G * TM
        est = (2 * RS * W2 * C_in * 2 + 2 * Kp * Cp * 2 + TM * Kp * 2
               + 2 * TM * Cp * 4 + 2 * TM * C_out * 4)
    else:
        # ---- strided path: im2col in JAX (blow-up only 9/stride^2), bf16 glue, pad folded ----
        xp = jnp.pad(x, ((0, 0), (1, 1), (1, 1), (0, 0)))
        taps = [xp[:, kh:kh + stride * H_out:stride, kw:kw + stride * W_out:stride, :]
                for kh in range(3) for kw in range(3)]
        patches = jnp.concatenate(taps, axis=-1).reshape(M, K)
        TM = min(_round_up(tm_rows, 8), _round_up(M, 8))
        M_pad = _round_up(M, TM)
        G = M_pad // TM
        x_in = jnp.pad(patches, ((0, M_pad - M), (0, Kp - K)))   # zero rows/cols: stat-neutral

        grid = (1, G)
        x_spec = pl.BlockSpec((TM, Kp), lambda z, i: (i, 0))
        row_block = lambda z, i: i
        build_patches = lambda p_ref: p_ref[...]
        keep_valid = lambda conv: conv
        flat_rows = M_pad
        est = 2 * TM * Kp * 2 + 2 * Kp * Cp * 2 + 2 * TM * Cp * 4 + 2 * TM * C_out * 4

    vmem_limit = _vmem_limit_bytes(est)
    w_spec = pl.BlockSpec((Kp, Cp), lambda *_: (0, 0))           # constant block -> stays resident
    vec_spec = pl.BlockSpec((1, Cp), lambda *_: (0, 0))
    part_spec = pl.BlockSpec((1, 1, Cp), lambda *g: (row_block(*g), 0, 0))
    out_spec = pl.BlockSpec((TM, C_out), lambda *g: (row_block(*g), 0))

    # ---- pass 1: per-tile partial per-channel sum / sum-of-squares (fully parallel) ----
    psum, psq = pl.pallas_call(
        functools.partial(_stats_kernel, build_patches=build_patches, keep_valid=keep_valid),
        out_shape=(jax.ShapeDtypeStruct((G, 1, Cp), jnp.float32),
                   jax.ShapeDtypeStruct((G, 1, Cp), jnp.float32)),
        grid=grid,
        in_specs=[x_spec, w_spec],
        out_specs=(part_spec, part_spec),
        compiler_params=pltpu.CompilerParams(
            dimension_semantics=("parallel", "parallel"),
            vmem_limit_bytes=vmem_limit),
    )(x_in, w2)

    # Tiny O(C) per-channel math folded into one scale/shift pair (f32).
    # NOTE: var = E[x^2] - mean^2 (clamped); partials are reduced hierarchically by XLA.
    #       Switch to a shifted / Welford accumulation if |mean| >> std ever becomes an issue.
    cnt = jnp.float32(M)                       # true element count; padded rows contribute zero
    mean = jnp.sum(psum, axis=0) / cnt         # [1, Cp]
    var = jnp.maximum(jnp.sum(psq, axis=0) / cnt - mean * mean, 0.0)
    inv_std = lax.rsqrt(var + BN_EPS)
    gamma_p = jnp.pad(gamma.astype(jnp.float32).reshape(1, C_out), ((0, 0), (0, Cp - C_out)))
    beta_p = jnp.pad(beta.astype(jnp.float32).reshape(1, C_out), ((0, 0), (0, Cp - C_out)))
    scale = gamma_p * inv_std
    shift = beta_p - mean * scale

    # ---- pass 2: recompute conv tile, fused BN affine + LeakyReLU ----
    out_flat = pl.pallas_call(
        functools.partial(_norm_kernel, build_patches=build_patches),
        out_shape=jax.ShapeDtypeStruct((flat_rows, C_out), jnp.float32),
        grid=grid,
        in_specs=[x_spec, w_spec, vec_spec, vec_spec],
        out_specs=out_spec,
        compiler_params=pltpu.CompilerParams(
            dimension_semantics=("parallel", "parallel"),
            vmem_limit_bytes=vmem_limit),
    )(x_in, w2, scale, shift)

    if stride == 1:
        out = out_flat.reshape(N, -1, W_out, C_out)[:, :H_out]
    else:
        out = out_flat[:M].reshape(N, H_out, W_out, C_out)
    # TODO(synk): in a full pipeline keep NHWC (and bf16) to skip this transpose round trip;
    #             NCHW f32 is kept here to match the PyTorch module's output exactly.
    return jnp.transpose(out, (0, 3, 1, 2))


def _reference(x_nchw, weight, bias, gamma, beta, stride=1):
    # Conv with bf16 operands / f32 accumulation (mirrors the kernel's MXU path);
    # BN (training-mode batch stats) and LeakyReLU in f32.
    conv = lax.conv_general_dilated(
        x_nchw.astype(jnp.bfloat16), weight.astype(jnp.bfloat16),
        (stride, stride), ((1, 1), (1, 1)),
        dimension_numbers=("NCHW", "OIHW", "NCHW"),
        preferred_element_type=jnp.float32)
    conv = conv + bias.reshape(1, -1, 1, 1)       # exactly cancelled by BN; kept for fidelity
    mean = conv.mean(axis=(0, 2, 3), keepdims=True)
    var = ((conv - mean) ** 2).mean(axis=(0, 2, 3), keepdims=True)
    y = (conv - mean) * lax.rsqrt(var + BN_EPS) * gamma.reshape(1, -1, 1, 1) \
        + beta.reshape(1, -1, 1, 1)
    return jnp.where(y >= 0, y, NEG_SLOPE * y)


if __name__ == "__main__":
    key = jax.random.PRNGKey(0)
    k_x, k_w, k_b = jax.random.split(key, 3)

    N, C_in, H, W = 2, 4, 16, 16
    C_out = 8
    stride = 1

    x = jax.random.normal(k_x, (N, C_in, H, W), dtype=jnp.float32)
    fan_in = C_in * 3 * 3
    bound = 1.0 / (fan_in ** 0.5)
    weight = jax.random.uniform(k_w, (C_out, C_in, 3, 3), jnp.float32, -bound, bound)
    bias = jax.random.uniform(k_b, (C_out,), jnp.float32, -bound, bound)
    gamma = jnp.ones((C_out,), jnp.float32)    # BatchNorm2d weight init
    beta = jnp.zeros((C_out,), jnp.float32)    # BatchNorm2d bias init

    out = conv_bn_relu(x, weight, bias, gamma, beta, stride=stride)
    jax.block_until_ready(out)

    ref = _reference(x, weight, bias, gamma, beta, stride=stride)
    assert out.shape == (N, C_out, H, W)
    err = float(jnp.max(jnp.abs(out - ref)))
    assert jnp.allclose(out, ref, rtol=1e-3, atol=1e-3), f"max err {err}"

    print("KERNEL_OK")
</pallas_src>

<mosaic_0001>
module attributes {stable_mosaic.version = 11 : i64} {
  func.func @_stats_kernel(%arg0: i32, %arg1: i32, %arg2: memref<1x18x18x4xbf16, #tpu.memory_space<vmem>>, %arg3: memref<128x128xbf16, #tpu.memory_space<vmem>>, %arg4: memref<1x1x128xf32, #tpu.memory_space<vmem>>, %arg5: memref<1x1x128xf32, #tpu.memory_space<vmem>>) attributes {dimension_semantics = [#tpu.dimension_semantics<parallel>, #tpu.dimension_semantics<parallel>], iteration_bounds = array<i64: 2, 1>, scalar_prefetch = 0 : i64, scratch_operands = 0 : i64, tpu.core_type = #tpu.core_type<tc>, window_params = [{transform_indices = @transform_0, window_bounds = array<i64: 1, 18, 18, 4>}, {pipeline_mode = #tpu.pipeline_mode<synchronous>, transform_indices = @transform_1, window_bounds = array<i64: 128, 128>}, {transform_indices = @transform_2, window_bounds = array<i64: 1, 1, 128>}, {transform_indices = @transform_3, window_bounds = array<i64: 1, 1, 128>}]} {
    %c0 = arith.constant 0 : index
    %c0_0 = arith.constant 0 : index
    %c0_1 = arith.constant 0 : index
    %c0_2 = arith.constant 0 : index
    %0 = vector.load %arg2[%c0, %c0_0, %c0_1, %c0_2] : memref<1x18x18x4xbf16, #tpu.memory_space<vmem>>, vector<1x18x18x4xbf16>
    %1 = vector.shape_cast %0 : vector<1x18x18x4xbf16> to vector<18x18x4xbf16>
    %2 = vector.extract_strided_slice %1 {offsets = [0, 0, 0], sizes = [16, 16, 4], strides = [1, 1, 1]} : vector<18x18x4xbf16> to vector<16x16x4xbf16>
    %3 = vector.extract_strided_slice %1 {offsets = [0, 1, 0], sizes = [16, 16, 4], strides = [1, 1, 1]} : vector<18x18x4xbf16> to vector<16x16x4xbf16>
    %4 = vector.extract_strided_slice %1 {offsets = [0, 2, 0], sizes = [16, 16, 4], strides = [1, 1, 1]} : vector<18x18x4xbf16> to vector<16x16x4xbf16>
    %5 = vector.extract_strided_slice %1 {offsets = [1, 0, 0], sizes = [16, 16, 4], strides = [1, 1, 1]} : vector<18x18x4xbf16> to vector<16x16x4xbf16>
    %6 = vector.extract_strided_slice %1 {offsets = [1, 1, 0], sizes = [16, 16, 4], strides = [1, 1, 1]} : vector<18x18x4xbf16> to vector<16x16x4xbf16>
    %7 = vector.extract_strided_slice %1 {offsets = [1, 2, 0], sizes = [16, 16, 4], strides = [1, 1, 1]} : vector<18x18x4xbf16> to vector<16x16x4xbf16>
    %8 = vector.extract_strided_slice %1 {offsets = [2, 0, 0], sizes = [16, 16, 4], strides = [1, 1, 1]} : vector<18x18x4xbf16> to vector<16x16x4xbf16>
    %9 = vector.extract_strided_slice %1 {offsets = [2, 1, 0], sizes = [16, 16, 4], strides = [1, 1, 1]} : vector<18x18x4xbf16> to vector<16x16x4xbf16>
    %10 = vector.extract_strided_slice %1 {offsets = [2, 2, 0], sizes = [16, 16, 4], strides = [1, 1, 1]} : vector<18x18x4xbf16> to vector<16x16x4xbf16>
    %cst = arith.constant 0.000000e+00 : bf16
    %11 = vector.broadcast %cst : bf16 to vector<16x16x92xbf16>
    %12 = tpu.concatenate %2, %3, %4, %5, %6, %7, %8, %9, %10, %11 in 2 : vector<16x16x4xbf16>, vector<16x16x4xbf16>, vector<16x16x4xbf16>, vector<16x16x4xbf16>, vector<16x16x4xbf16>, vector<16x16x4xbf16>, vector<16x16x4xbf16>, vector<16x16x4xbf16>, vector<16x16x4xbf16>, vector<16x16x92xbf16> -> vector<16x16x128xbf16>
    %13 = vector.shape_cast %12 : vector<16x16x128xbf16> to vector<256x128xbf16>
    %c0_3 = arith.constant 0 : index
    %c0_4 = arith.constant 0 : index
    %14 = vector.load %arg3[%c0_3, %c0_4] : memref<128x128xbf16, #tpu.memory_space<vmem>>, vector<128x128xbf16>
    %cst_5 = arith.constant dense<0.000000e+00> : vector<256x128xf32>
    %15 = tpu.matmul %13, %14, %cst_5 {dimension_numbers = #tpu.dot_dimension_numbers<[1], [0], [0], [1], [0, 0, 1, 1], [], []>} : vector<256x128xbf16>, vector<128x128xbf16>, vector<256x128xf32> -> vector<256x128xf32>
    %cst_6 = arith.constant dense<0.000000e+00> : vector<128xf32>
    %16 = vector.multi_reduction <add>, %15, %cst_6 [0] : vector<256x128xf32> to vector<128xf32>
    %17 = vector.shape_cast %16 : vector<128xf32> to vector<1x128xf32>
    %c0_7 = arith.constant 0 : index
    %c0_8 = arith.constant 0 : index
    %c0_9 = arith.constant 0 : index
    %18 = vector.load %arg4[%c0_7, %c0_8, %c0_9] : memref<1x1x128xf32, #tpu.memory_space<vmem>>, vector<1x1x128xf32>
    %19 = vector.shape_cast %18 : vector<1x1x128xf32> to vector<1x128xf32>
    %20 = vector.shape_cast %17 : vector<1x128xf32> to vector<1x1x128xf32>
    tpu.vector_store %arg4[%c0_7, %c0_8, %c0_9], %20 {strides = array<i32>} : memref<1x1x128xf32, #tpu.memory_space<vmem>>, vector<1x1x128xf32>,
    %21 = arith.mulf %15, %15 : vector<256x128xf32>
    %cst_10 = arith.constant dense<0.000000e+00> : vector<128xf32>
    %22 = vector.multi_reduction <add>, %21, %cst_10 [0] : vector<256x128xf32> to vector<128xf32>
    %23 = vector.shape_cast %22 : vector<128xf32> to vector<1x128xf32>
    %c0_11 = arith.constant 0 : index
    %c0_12 = arith.constant 0 : index
    %c0_13 = arith.constant 0 : index
    %24 = vector.load %arg5[%c0_11, %c0_12, %c0_13] : memref<1x1x128xf32, #tpu.memory_space<vmem>>, vector<1x1x128xf32>
    %25 = vector.shape_cast %24 : vector<1x1x128xf32> to vector<1x128xf32>
    %26 = vector.shape_cast %23 : vector<1x128xf32> to vector<1x1x128xf32>
    tpu.vector_store %arg5[%c0_11, %c0_12, %c0_13], %26 {strides = array<i32>} : memref<1x1x128xf32, #tpu.memory_space<vmem>>, vector<1x1x128xf32>,
    return
  }
  func.func @transform_0(%arg0: i32, %arg1: i32) -> (i32, i32, i32, i32) {
    %c1_i32 = arith.constant 1 : i32
    %0 = arith.muli %arg0, %c1_i32 : i32
    %1 = arith.addi %0, %arg1 : i32
    %c0_i32 = arith.constant 0 : i32
    %c0_i32_0 = arith.constant 0 : i32
    %c0_i32_1 = arith.constant 0 : i32
    %c0_i32_2 = arith.constant 0 : i32
    return %1, %c0_i32, %c0_i32_0, %c0_i32_1 : i32, i32, i32, i32
  }
  func.func @transform_1(%arg0: i32, %arg1: i32) -> (i32, i32) {
    %c0_i32 = arith.constant 0 : i32
    %c0_i32_0 = arith.constant 0 : i32
    %c0_i32_1 = arith.constant 0 : i32
    return %c0_i32, %c0_i32_0 : i32, i32
  }
  func.func @transform_2(%arg0: i32, %arg1: i32) -> (i32, i32, i32) {
    %c1_i32 = arith.constant 1 : i32
    %0 = arith.muli %arg0, %c1_i32 : i32
    %1 = arith.addi %0, %arg1 : i32
    %c0_i32 = arith.constant 0 : i32
    %c0_i32_0 = arith.constant 0 : i32
    %c0_i32_1 = arith.constant 0 : i32
    return %1, %c0_i32, %c0_i32_0 : i32, i32, i32
  }
  func.func @transform_3(%arg0: i32, %arg1: i32) -> (i32, i32, i32) {
    %c1_i32 = arith.constant 1 : i32
    %0 = arith.muli %arg0, %c1_i32 : i32
    %1 = arith.addi %0, %arg1 : i32
    %c0_i32 = arith.constant 0 : i32
    %c0_i32_0 = arith.constant 0 : i32
    %c0_i32_1 = arith.constant 0 : i32
    return %1, %c0_i32, %c0_i32_0 : i32, i32, i32
  }
}

module attributes {stable_mosaic.version = 11 : i64} {
  func.func @_norm_kernel(%arg0: i32, %arg1: i32, %arg2: memref<1x18x18x4xbf16, #tpu.memory_space<vmem>>, %arg3: memref<128x128xbf16, #tpu.memory_space<vmem>>, %arg4: memref<1x128xf32, #tpu.memory_space<vmem>>, %arg5: memref<1x128xf32, #tpu.memory_space<vmem>>, %arg6: memref<256x8xf32, #tpu.memory_space<vmem>>) attributes {dimension_semantics = [#tpu.dimension_semantics<parallel>, #tpu.dimension_semantics<parallel>], iteration_bounds = array<i64: 2, 1>, scalar_prefetch = 0 : i64, scratch_operands = 0 : i64, tpu.core_type = #tpu.core_type<tc>, window_params = [{transform_indices = @transform_0, window_bounds = array<i64: 1, 18, 18, 4>}, {pipeline_mode = #tpu.pipeline_mode<synchronous>, transform_indices = @transform_1, window_bounds = array<i64: 128, 128>}, {pipeline_mode = #tpu.pipeline_mode<synchronous>, transform_indices = @transform_2, window_bounds = array<i64: 1, 128>}, {pipeline_mode = #tpu.pipeline_mode<synchronous>, transform_indices = @transform_3, window_bounds = array<i64: 1, 128>}, {transform_indices = @transform_4, window_bounds = array<i64: 256, 8>}]} {
    %c0 = arith.constant 0 : index
    %c0_0 = arith.constant 0 : index
    %c0_1 = arith.constant 0 : index
    %c0_2 = arith.constant 0 : index
    %0 = vector.load %arg2[%c0, %c0_0, %c0_1, %c0_2] : memref<1x18x18x4xbf16, #tpu.memory_space<vmem>>, vector<1x18x18x4xbf16>
    %1 = vector.shape_cast %0 : vector<1x18x18x4xbf16> to vector<18x18x4xbf16>
    %2 = vector.extract_strided_slice %1 {offsets = [0, 0, 0], sizes = [16, 16, 4], strides = [1, 1, 1]} : vector<18x18x4xbf16> to vector<16x16x4xbf16>
    %3 = vector.extract_strided_slice %1 {offsets = [0, 1, 0], sizes = [16, 16, 4], strides = [1, 1, 1]} : vector<18x18x4xbf16> to vector<16x16x4xbf16>
    %4 = vector.extract_strided_slice %1 {offsets = [0, 2, 0], sizes = [16, 16, 4], strides = [1, 1, 1]} : vector<18x18x4xbf16> to vector<16x16x4xbf16>
    %5 = vector.extract_strided_slice %1 {offsets = [1, 0, 0], sizes = [16, 16, 4], strides = [1, 1, 1]} : vector<18x18x4xbf16> to vector<16x16x4xbf16>
    %6 = vector.extract_strided_slice %1 {offsets = [1, 1, 0], sizes = [16, 16, 4], strides = [1, 1, 1]} : vector<18x18x4xbf16> to vector<16x16x4xbf16>
    %7 = vector.extract_strided_slice %1 {offsets = [1, 2, 0], sizes = [16, 16, 4], strides = [1, 1, 1]} : vector<18x18x4xbf16> to vector<16x16x4xbf16>
    %8 = vector.extract_strided_slice %1 {offsets = [2, 0, 0], sizes = [16, 16, 4], strides = [1, 1, 1]} : vector<18x18x4xbf16> to vector<16x16x4xbf16>
    %9 = vector.extract_strided_slice %1 {offsets = [2, 1, 0], sizes = [16, 16, 4], strides = [1, 1, 1]} : vector<18x18x4xbf16> to vector<16x16x4xbf16>
    %10 = vector.extract_strided_slice %1 {offsets = [2, 2, 0], sizes = [16, 16, 4], strides = [1, 1, 1]} : vector<18x18x4xbf16> to vector<16x16x4xbf16>
    %cst = arith.constant 0.000000e+00 : bf16
    %11 = vector.broadcast %cst : bf16 to vector<16x16x92xbf16>
    %12 = tpu.concatenate %2, %3, %4, %5, %6, %7, %8, %9, %10, %11 in 2 : vector<16x16x4xbf16>, vector<16x16x4xbf16>, vector<16x16x4xbf16>, vector<16x16x4xbf16>, vector<16x16x4xbf16>, vector<16x16x4xbf16>, vector<16x16x4xbf16>, vector<16x16x4xbf16>, vector<16x16x4xbf16>, vector<16x16x92xbf16> -> vector<16x16x128xbf16>
    %13 = vector.shape_cast %12 : vector<16x16x128xbf16> to vector<256x128xbf16>
    %c0_3 = arith.constant 0 : index
    %c0_4 = arith.constant 0 : index
    %14 = vector.load %arg3[%c0_3, %c0_4] : memref<128x128xbf16, #tpu.memory_space<vmem>>, vector<128x128xbf16>
    %cst_5 = arith.constant dense<0.000000e+00> : vector<256x128xf32>
    %15 = tpu.matmul %13, %14, %cst_5 {dimension_numbers = #tpu.dot_dimension_numbers<[1], [0], [0], [1], [0, 0, 1, 1], [], []>} : vector<256x128xbf16>, vector<128x128xbf16>, vector<256x128xf32> -> vector<256x128xf32>
    %c0_6 = arith.constant 0 : index
    %c0_7 = arith.constant 0 : index
    %16 = vector.load %arg4[%c0_6, %c0_7] : memref<1x128xf32, #tpu.memory_space<vmem>>, vector<1x128xf32>
    %17 = vector.broadcast %16 : vector<1x128xf32> to vector<256x128xf32>
    %18 = arith.mulf %15, %17 : vector<256x128xf32>
    %c0_8 = arith.constant 0 : index
    %c0_9 = arith.constant 0 : index
    %19 = vector.load %arg5[%c0_8, %c0_9] : memref<1x128xf32, #tpu.memory_space<vmem>>, vector<1x128xf32>
    %20 = vector.broadcast %19 : vector<1x128xf32> to vector<256x128xf32>
    %21 = arith.addf %18, %20 : vector<256x128xf32>
    %cst_10 = arith.constant 0.000000e+00 : f32
    %22 = vector.broadcast %cst_10 : f32 to vector<256x128xf32>
    %23 = arith.cmpf oge, %21, %22 : vector<256x128xf32>
    %cst_11 = arith.constant 0.00999999977 : f32
    %24 = vector.broadcast %cst_11 : f32 to vector<256x128xf32>
    %25 = arith.mulf %24, %21 : vector<256x128xf32>
    %26 = arith.select %23, %21, %25 : vector<256x128xi1>, vector<256x128xf32>
    %27 = vector.extract_strided_slice %26 {offsets = [0, 0], sizes = [256, 8], strides = [1, 1]} : vector<256x128xf32> to vector<256x8xf32>
    %c0_12 = arith.constant 0 : index
    %c0_13 = arith.constant 0 : index
    %28 = vector.load %arg6[%c0_12, %c0_13] : memref<256x8xf32, #tpu.memory_space<vmem>>, vector<256x8xf32>
    tpu.vector_store %arg6[%c0_12, %c0_13], %27 {strides = array<i32>} : memref<256x8xf32, #tpu.memory_space<vmem>>, vector<256x8xf32>,
    return
  }
  func.func @transform_0(%arg0: i32, %arg1: i32) -> (i32, i32, i32, i32) {
    %c1_i32 = arith.constant 1 : i32
    %0 = arith.muli %arg0, %c1_i32 : i32
    %1 = arith.addi %0, %arg1 : i32
    %c0_i32 = arith.constant 0 : i32
    %c0_i32_0 = arith.constant 0 : i32
    %c0_i32_1 = arith.constant 0 : i32
    %c0_i32_2 = arith.constant 0 : i32
    return %1, %c0_i32, %c0_i32_0, %c0_i32_1 : i32, i32, i32, i32
  }
  func.func @transform_1(%arg0: i32, %arg1: i32) -> (i32, i32) {
    %c0_i32 = arith.constant 0 : i32
    %c0_i32_0 = arith.constant 0 : i32
    %c0_i32_1 = arith.constant 0 : i32
    return %c0_i32, %c0_i32_0 : i32, i32
  }
  func.func @transform_2(%arg0: i32, %arg1: i32) -> (i32, i32) {
    %c0_i32 = arith.constant 0 : i32
    %c0_i32_0 = arith.constant 0 : i32
    %c0_i32_1 = arith.constant 0 : i32
    return %c0_i32, %c0_i32_0 : i32, i32
  }
  func.func @transform_3(%arg0: i32, %arg1: i32) -> (i32, i32) {
    %c0_i32 = arith.constant 0 : i32
    %c0_i32_0 = arith.constant 0 : i32
    %c0_i32_1 = arith.constant 0 : i32
    return %c0_i32, %c0_i32_0 : i32, i32
  }
  func.func @transform_4(%arg0: i32, %arg1: i32) -> (i32, i32) {
    %c1_i32 = arith.constant 1 : i32
    %0 = arith.muli %arg0, %c1_i32 : i32
    %1 = arith.addi %0, %arg1 : i32
    %c0_i32 = arith.constant 0 : i32
    %c0_i32_0 = arith.constant 0 : i32
    return %1, %c0_i32 : i32, i32
  }
}

</mosaic_0001>

<llo_original>
// kernel: conv_bn_relu.2
$region0: #{conv_bn_relu.2}
  #allocation0 [shape = 'u32[]', space=smem, size = 0x4, offset = 0x4, fixed_abs, tag = 'smem constant byte address 0x4 - core index']
  #allocation1 [shape = 'u32[144,128]{1,0:T(1,128)}', space=vmem, size = 0x12000, scoped, tag = 'internal scratch']
  %s0 = inlined_call_operand.vmem [shape: bf16[2,18,18,4], index: 0, kind: input, shape index: {}]
  %s1 = inlined_call_operand.vmem [shape: bf16[128,128], index: 1, kind: input, shape index: {}]
  %s2 = inlined_call_operand.vmem [shape: f32[2,1,128], index: 2, kind: output, shape index: {0}]
  %s3 = inlined_call_operand.vmem [shape: f32[2,1,128], index: 3, kind: output, shape index: {1}]
  %4 = xla_tuple %s2, %s3
  %s5 = sld [smem:[#allocation0]]
  $region49: #{conv_bn_relu.2} parent=0
    _
  %s7 = ssub.s32 1, %s5
  %s8 = scalar_select 0, %s7, %s5
  loop: start=0, step=1, limit=4
  $region2: #{conv_bn_relu.2} parent=0 // loop_pre_header
    _
  $region3: #{conv_bn_relu.2} parent=0 // loop_header
    %s10 = sphi 0, %s14
    %p11 = scmp.ge.s32.totalorder %s10, 4
    %s17 = sphi 0, %s29
    %s18 = sphi 0, %s25
    %s19 = sphi 0, %s17
    %s20 = sphi 0, %s18
    %s21 = sphi 0, %s19
    %s22 = sphi 0, %s20
    %s34 = sphi 0, %s36
    %s37 = sphi 0, %s34
    %s38 = sphi 0, %s37
    %s54 = sphi 0, %s38
    %s58 = sphi 0, %s58
    %s60 = sphi 0, %s58
    %s61 = sphi 0, %s60
    %s75 = sphi 0, %s61
    %s83 = sphi 0, %s85
    %s86 = sphi 0, %s83
    %s87 = sphi 0, %s86
    %s103 = sphi 0, %s87
    %s111 = sphi 0, %s113
    %s114 = sphi 0, %s111
    %s115 = sphi 0, %s114
    %s131 = sphi 0, %s115
  $region4: #{conv_bn_relu.2} parent=0 // loop_header_branch
    %13 = sbr.rel (%p11) target = $region8
  $region5: #{conv_bn_relu.2} parent=0 // loop_body
    %s15 = ssub.s32 %s10, 1
    %s16 = ssub.s32 %s10, 2
    %s23 = sadd.s32 1, %s18
    %p24 = scmp.ge.s32.totalorder %s23, 1
    %s25 = scalar_select %p24, 0, %s23
    %s26 = sadd.s32 1, %s17
    %s27 = scalar_select %p24, %s26, %s17
    %p28 = scmp.ge.s32.totalorder %s27, 2
    %s29 = scalar_select %p28, 0, %s27
    %s30 = sadd.s32 %s17, %s18
    %s31 = sadd.s32 %s29, %s25
    %s32 = ssub.s32 %s30, %s31
    %p33 = scmp.eq.s32.totalorder %s32, 0
    %s35 = sadd.s32 %s34, 1
    %s36 = scalar_select %p33, %s34, %s35
    %p39 = pneg %p33
    %p40 = scmp.eq.s32.totalorder %s10, 1
    %p41 = por %p39, %p40
    %p42 = scmp.ne.s32.totalorder %s34, %s37
    %p43 = scmp.eq.s32.totalorder %s10, 0
    %p44 = por %p42, %p43
    %p45 = scmp.ne.s32.totalorder %s34, %s37
    %p46 = scmp.eq.s32.totalorder %s15, 1
    %p47 = por %p45, %p46
    %p48 = scmp.ne.s32.totalorder %s37, %s38
    %p49 = scmp.eq.s32.totalorder %s15, 0
    %p50 = por %p48, %p49
    %p51 = scmp.ne.s32.totalorder %s37, %s38
    %p52 = scmp.eq.s32.totalorder %s16, 1
    %p53 = por %p51, %p52
    %p55 = scmp.ne.s32.totalorder %s38, %s54
    %p56 = scmp.eq.s32.totalorder %s16, 0
    %p57 = por %p55, %p56
    %s59 = sadd.s32 %s58, 1
    %p62 = scmp.eq.s32.totalorder %s10, 1
    %p63 = scmp.ne.s32.totalorder %s58, %s60
    %p64 = scmp.eq.s32.totalorder %s10, 0
    %p65 = por %p63, %p64
    %p66 = scmp.ne.s32.totalorder %s58, %s60
    %p67 = scmp.eq.s32.totalorder %s15, 1
    %p68 = por %p66, %p67
    %p69 = scmp.ne.s32.totalorder %s60, %s61
    %p70 = scmp.eq.s32.totalorder %s15, 0
    %p71 = por %p69, %p70
    %p72 = scmp.ne.s32.totalorder %s60, %s61
    %p73 = scmp.eq.s32.totalorder %s16, 1
    %p74 = por %p72, %p73
    %p76 = scmp.ne.s32.totalorder %s61, %s75
    %p77 = scmp.eq.s32.totalorder %s16, 0
    %p78 = por %p76, %p77
    %s79 = sadd.s32 %s17, %s18
    %s80 = sadd.s32 %s29, %s25
    %s81 = ssub.s32 %s79, %s80
    %p82 = scmp.eq.s32.totalorder %s81, 0
    %s84 = sadd.s32 %s83, 1
    %s85 = scalar_select %p82, %s83, %s84
    %p88 = pneg %p82
    %p89 = scmp.eq.s32.totalorder %s10, 1
    %p90 = por %p88, %p89
    %p91 = scmp.ne.s32.totalorder %s83, %s86
    %p92 = scmp.eq.s32.totalorder %s10, 0
    %p93 = por %p91, %p92
    %p94 = scmp.ne.s32.totalorder %s83, %s86
    %p95 = scmp.eq.s32.totalorder %s15, 1
    %p96 = por %p94, %p95
    %p97 = scmp.ne.s32.totalorder %s86, %s87
    %p98 = scmp.eq.s32.totalorder %s15, 0
    %p99 = por %p97, %p98
    %p100 = scmp.ne.s32.totalorder %s86, %s87
    %p101 = scmp.eq.s32.totalorder %s16, 1
    %p102 = por %p100, %p101
    %p104 = scmp.ne.s32.totalorder %s87, %s103
    %p105 = scmp.eq.s32.totalorder %s16, 0
    %p106 = por %p104, %p105
    %s107 = sadd.s32 %s17, %s18
    %s108 = sadd.s32 %s29, %s25
    %s109 = ssub.s32 %s107, %s108
    %p110 = scmp.eq.s32.totalorder %s109, 0
    %s112 = sadd.s32 %s111, 1
    %s113 = scalar_select %p110, %s111, %s112
    %p116 = pneg %p110
    %p117 = scmp.eq.s32.totalorder %s10, 1
    %p118 = por %p116, %p117
    %p119 = scmp.ne.s32.totalorder %s111, %s114
    %p120 = scmp.eq.s32.totalorder %s10, 0
    %p121 = por %p119, %p120
    %p122 = scmp.ne.s32.totalorder %s111, %s114
    %p123 = scmp.eq.s32.totalorder %s15, 1
    %p124 = por %p122, %p123
    %p125 = scmp.ne.s32.totalorder %s114, %s115
    %p126 = scmp.eq.s32.totalorder %s15, 0
    %p127 = por %p125, %p126
    %p128 = scmp.ne.s32.totalorder %s114, %s115
    %p129 = scmp.eq.s32.totalorder %s16, 1
    %p130 = por %p128, %p129
    %p132 = scmp.ne.s32.totalorder %s115, %s131
    %p133 = scmp.eq.s32.totalorder %s16, 0
    %p134 = por %p132, %p133
    %p135 = scmp.le.s32.totalorder 1, %s10
    %p136 = scmp.lt.s32.totalorder %s10, 3
    %p137 = pnand %p135, %p136
    %p138 = pneg %p137
    // Predicated region
    $region9: #{conv_bn_relu.2} parent=5 // pred_check
      _
    $region10: #{conv_bn_relu.2} parent=5 // pred_check_branch
      %140 = sbr.rel (%p137) target = $region12
    $region11: #{conv_bn_relu.2} parent=5 // pred_region
      %s141 = ssub.s32 %s10, 1
      // Predicated region
      $region13: #{conv_bn_relu.2} parent=11 // pred_check
        %p142 = pneg %p71
      $region14: #{conv_bn_relu.2} parent=11 // pred_check_branch
        %144 = sbr.rel (%p142) target = $region16
      $region15: #{conv_bn_relu.2} parent=11 // pred_region
        _
      $region16: #{conv_bn_relu.2} parent=11 // pred_fallthru
        _
    $region12: #{conv_bn_relu.2} parent=5 // pred_fallthru
      _
    %p145 = scmp.lt.s32.totalorder %s10, 2
    // Predicated region
    $region17: #{conv_bn_relu.2} parent=5 // pred_check
      %p146 = pneg %p145
    $region18: #{conv_bn_relu.2} parent=5 // pred_check_branch
      %148 = sbr.rel (%p146) target = $region20
    $region19: #{conv_bn_relu.2} parent=5 // pred_region
      // Predicated region
      $region21: #{conv_bn_relu.2} parent=19 // pred_check
        %p149 = pneg %p44
      $region22: #{conv_bn_relu.2} parent=19 // pred_check_branch
        %151 = sbr.rel (%p149) target = $region24
      $region23: #{conv_bn_relu.2} parent=19 // pred_region
        %s152 = sadd.s32 %s17, %s18
        %p153 = scmp.lt.s32.totalorder %s152, 1
        %s154 = scalar_select %p153, %s152, 1
        %s155 = smul.addr %s154, 54
        %s156 = smul.addr %s155, 4
        %s157 = scalar_lea.vmem %s0, %s156
        %s158 = sadd.s32 %s17, %s18
      $region24: #{conv_bn_relu.2} parent=19 // pred_fallthru
        _
    $region20: #{conv_bn_relu.2} parent=5 // pred_fallthru
      _
    %p159 = scmp.le.s32.totalorder 1, %s10
    %p160 = scmp.lt.s32.totalorder %s10, 3
    %p161 = pnand %p159, %p160
    %p162 = pneg %p161
    // Predicated region
    $region25: #{conv_bn_relu.2} parent=5 // pred_check
      _
    $region26: #{conv_bn_relu.2} parent=5 // pred_check_branch
      %164 = sbr.rel (%p161) target = $region28
    $region27: #{conv_bn_relu.2} parent=5 // pred_region
      %s165 = ssub.s32 %s10, 1
      %s166 = sadd.s32 %s19, %s20
      %p167 = scmp.lt.s32.totalorder %s166, 1
      %s168 = scalar_select %p167, %s166, 1
      %s169 = smul.addr %s168, 54
      %s170 = smul.addr %s169, 4
      %s171 = scalar_lea.vmem %s0, %s170
      %p172 = pneg %p50
      %p173 = pneg %p47
      %p174 = pneg %p71
      %p175 = pneg %p68
      %p176 = pneg %p99
      %p177 = pneg %p96
      %s178 = sadd.s32 %s19, %s20
      %p179 = scmp.lt.s32.totalorder %s178, 1
      %s180 = scalar_select %p179, %s178, 1
      %s181 = scalar_lea.vmem %s2, %s180
      %p182 = pneg %p127
      %p183 = pneg %p124
      %s184 = sadd.s32 %s19, %s20
      %p185 = scmp.lt.s32.totalorder %s184, 1
      %s186 = scalar_select %p185, %s184, 1
      %s187 = scalar_lea.vmem %s3, %s186
      %s188 = sadd.s32 %s19, %s20
      %p189 = scmp.lt.s32.totalorder %s188, 1
      %s190 = scalar_select %p189, %s188, 1
      %s191 = smul.addr %s190, 54
      %s192 = smul.addr %s191, 4
      %s193 = scalar_lea.vmem %s0, %s192
      %s194 = sadd.s32 %s19, %s20
      %s195 = sadd.s32 %s19, %s20
      %p196 = scmp.lt.s32.totalorder %s195, 1
      %s197 = scalar_select %p196, %s195, 1
      %s198 = scalar_lea.vmem %s2, %s197
      %s199 = sadd.s32 %s19, %s20
      %s200 = sadd.s32 %s19, %s20
      %p201 = scmp.lt.s32.totalorder %s200, 1
      %s202 = scalar_select %p201, %s200, 1
      %s203 = scalar_lea.vmem %s3, %s202
      %s204 = sadd.s32 %s19, %s20
      %v206 = vld [vmem:[%s193] sm:$0xf]
      %v207 = vld [vmem:[%s193 + $0x4] sm:$0xf]
      %v208 = vld [vmem:[%s193 + $0x8] sm:$0x1]
      %v209 = vld [vmem:[%s193 + $0xc] sm:$0xf]
      %v210 = vld [vmem:[%s193 + $0x10] sm:$0xf]
      %v211 = vld [vmem:[%s193 + $0x14] sm:$0x1]
      %v212 = vld [vmem:[%s193 + $0x18] sm:$0xf]
      %v213 = vld [vmem:[%s193 + $0x1c] sm:$0xf]
      %v214 = vld [vmem:[%s193 + $0x20] sm:$0x1]
      %v215 = vld [vmem:[%s193 + $0x24] sm:$0xf]
      %v216 = vld [vmem:[%s193 + $0x28] sm:$0xf]
      %v217 = vld [vmem:[%s193 + $0x2c] sm:$0x1]
      %v218 = vld [vmem:[%s193 + $0x30] sm:$0xf]
      %v219 = vld [vmem:[%s193 + $0x34] sm:$0xf]
      %v220 = vld [vmem:[%s193 + $0x38] sm:$0x1]
      %v221 = vld [vmem:[%s193 + $0x3c] sm:$0xf]
      %v222 = vld [vmem:[%s193 + $0x40] sm:$0xf]
      %v223 = vld [vmem:[%s193 + $0x44] sm:$0x1]
      %v224 = vld [vmem:[%s193 + $0x48] sm:$0xf]
      %v225 = vld [vmem:[%s193 + $0x4c] sm:$0xf]
      %v226 = vld [vmem:[%s193 + $0x50] sm:$0x1]
      %v227 = vld [vmem:[%s193 + $0x54] sm:$0xf]
      %v228 = vld [vmem:[%s193 + $0x58] sm:$0xf]
      %v229 = vld [vmem:[%s193 + $0x5c] sm:$0x1]
      %v230 = vld [vmem:[%s193 + $0x60] sm:$0xf]
      %v231 = vld [vmem:[%s193 + $0x64] sm:$0xf]
      %v232 = vld [vmem:[%s193 + $0x68] sm:$0x1]
      %v233 = vld [vmem:[%s193 + $0x6c] sm:$0xf]
      %v234 = vld [vmem:[%s193 + $0x70] sm:$0xf]
      %v235 = vld [vmem:[%s193 + $0x74] sm:$0x1]
      %v236 = vld [vmem:[%s193 + $0x78] sm:$0xf]
      %v237 = vld [vmem:[%s193 + $0x7c] sm:$0xf]
      %v238 = vld [vmem:[%s193 + $0x80] sm:$0x1]
      %v239 = vld [vmem:[%s193 + $0x84] sm:$0xf]
      %v240 = vld [vmem:[%s193 + $0x88] sm:$0xf]
      %v241 = vld [vmem:[%s193 + $0x8c] sm:$0x1]
      %v242 = vld [vmem:[%s193 + $0x90] sm:$0xf]
      %v243 = vld [vmem:[%s193 + $0x94] sm:$0xf]
      %v244 = vld [vmem:[%s193 + $0x98] sm:$0x1]
      %v245 = vld [vmem:[%s193 + $0x9c] sm:$0xf]
      %v246 = vld [vmem:[%s193 + $0xa0] sm:$0xf]
      %v247 = vld [vmem:[%s193 + $0xa4] sm:$0x1]
      %v248 = vld [vmem:[%s193 + $0xa8] sm:$0xf]
      %v249 = vld [vmem:[%s193 + $0xac] sm:$0xf]
      %v250 = vld [vmem:[%s193 + $0xb0] sm:$0x1]
      %v251 = vld [vmem:[%s193 + $0xb4] sm:$0xf]
      %v252 = vld [vmem:[%s193 + $0xb8] sm:$0xf]
      %v253 = vld [vmem:[%s193 + $0xbc] sm:$0x1]
      %v254 = vld [vmem:[%s193 + $0xc0] sm:$0xf]
      %v255 = vld [vmem:[%s193 + $0xc4] sm:$0xf]
      %v256 = vld [vmem:[%s193 + $0xc8] sm:$0x1]
      %v257 = vld [vmem:[%s193 + $0xcc] sm:$0xf]
      %v258 = vld [vmem:[%s193 + $0xd0] sm:$0xf]
      %v259 = vld [vmem:[%s193 + $0xd4] sm:$0x1]
      %v292 = vunpack.c.l.b16 %v206
      %v293 = vunpack.c.l.b16 %v207
      %v294 = vunpack.c.l.b16 %v209
      %v295 = vunpack.c.l.b16 %v210
      %v296 = vunpack.c.l.b16 %v212
      %v297 = vunpack.c.l.b16 %v213
      %v298 = vunpack.c.l.b16 %v215
      %v299 = vunpack.c.l.b16 %v216
      %v300 = vunpack.c.l.b16 %v218
      %v301 = vunpack.c.l.b16 %v219
      %v302 = vunpack.c.l.b16 %v221
      %v303 = vunpack.c.l.b16 %v222
      %v304 = vunpack.c.l.b16 %v224
      %v305 = vunpack.c.l.b16 %v225
      %v306 = vunpack.c.l.b16 %v227
      %v307 = vunpack.c.l.b16 %v228
      %v308 = vunpack.c.l.b16 %v230
      %v309 = vunpack.c.l.b16 %v231
      %v310 = vunpack.c.l.b16 %v233
      %v311 = vunpack.c.l.b16 %v234
      %v312 = vunpack.c.l.b16 %v236
      %v313 = vunpack.c.l.b16 %v237
      %v314 = vunpack.c.l.b16 %v239
      %v315 = vunpack.c.l.b16 %v240
      %v316 = vunpack.c.l.b16 %v242
      %v317 = vunpack.c.l.b16 %v243
      %v318 = vunpack.c.l.b16 %v245
      %v319 = vunpack.c.l.b16 %v246
      %v320 = vunpack.c.l.b16 %v248
      %v321 = vunpack.c.l.b16 %v249
      %v322 = vunpack.c.l.b16 %v251
      %v323 = vunpack.c.l.b16 %v252
      %v324 = vpack.c.b16 %v293, %v292
      %v325 = vpack.c.b16 %v295, %v294
      %v326 = vpack.c.b16 %v297, %v296
      %v327 = vpack.c.b16 %v299, %v298
      %v328 = vpack.c.b16 %v301, %v300
      %v329 = vpack.c.b16 %v303, %v302
      %v330 = vpack.c.b16 %v305, %v304
      %v331 = vpack.c.b16 %v307, %v306
      %v332 = vpack.c.b16 %v309, %v308
      %v333 = vpack.c.b16 %v311, %v310
      %v334 = vpack.c.b16 %v313, %v312
      %v335 = vpack.c.b16 %v315, %v314
      %v336 = vpack.c.b16 %v317, %v316
      %v337 = vpack.c.b16 %v319, %v318
      %v338 = vpack.c.b16 %v321, %v320
      %v339 = vpack.c.b16 %v323, %v322
      %v356 = vunpack.c.l.b16 %v208
      %v357 = vunpack.c.l.b16 %v211
      %v358 = vunpack.c.l.b16 %v214
      %v359 = vunpack.c.l.b16 %v217
      %v360 = vunpack.c.l.b16 %v220
      %v361 = vunpack.c.l.b16 %v223
      %v362 = vunpack.c.l.b16 %v226
      %v363 = vunpack.c.l.b16 %v229
      %v364 = vunpack.c.l.b16 %v232
      %v365 = vunpack.c.l.b16 %v235
      %v366 = vunpack.c.l.b16 %v238
      %v367 = vunpack.c.l.b16 %v241
      %v368 = vunpack.c.l.b16 %v244
      %v369 = vunpack.c.l.b16 %v247
      %v370 = vunpack.c.l.b16 %v250
      %v371 = vunpack.c.l.b16 %v253
      %v372 = vpack.c.b16 %v356, %v356
      %v373 = vpack.c.b16 %v357, %v357
      %v374 = vpack.c.b16 %v358, %v358
      %v375 = vpack.c.b16 %v359, %v359
      %v376 = vpack.c.b16 %v360, %v360
      %v377 = vpack.c.b16 %v361, %v361
      %v378 = vpack.c.b16 %v362, %v362
      %v379 = vpack.c.b16 %v363, %v363
      %v380 = vpack.c.b16 %v364, %v364
      %v381 = vpack.c.b16 %v365, %v365
      %v382 = vpack.c.b16 %v366, %v366
      %v383 = vpack.c.b16 %v367, %v367
      %v384 = vpack.c.b16 %v368, %v368
      %v385 = vpack.c.b16 %v369, %v369
      %v386 = vpack.c.b16 %v370, %v370
      %v387 = vpack.c.b16 %v371, %v371
      %vm388 = vsmask.f32 7424
      %v390 = vshrl.u32 %v324, 16
      %v392 = vshll.u32 %v324, 16
      %v394 = vrot.slane %v392, 1
      %v395 = vor.u32 %v390, %v394
      %v397 = vshll.u32 %v372, 16
      %v399 = vrot.slane %v397, 1
      %v400 = vsel %vm388, %v395, %v399
      %v402 = vshrl.u32 %v325, 16
      %v404 = vshll.u32 %v325, 16
      %v406 = vrot.slane %v404, 1
      %v407 = vor.u32 %v402, %v406
      %v409 = vshll.u32 %v373, 16
      %v411 = vrot.slane %v409, 1
      %v412 = vsel %vm388, %v407, %v411
      %v414 = vshrl.u32 %v326, 16
      %v416 = vshll.u32 %v326, 16
      %v418 = vrot.slane %v416, 1
      %v419 = vor.u32 %v414, %v418
      %v421 = vshll.u32 %v374, 16
      %v423 = vrot.slane %v421, 1
      %v424 = vsel %vm388, %v419, %v423
      %v426 = vshrl.u32 %v327, 16
      %v428 = vshll.u32 %v327, 16
      %v430 = vrot.slane %v428, 1
      %v431 = vor.u32 %v426, %v430
      %v433 = vshll.u32 %v375, 16
      %v435 = vrot.slane %v433, 1
      %v436 = vsel %vm388, %v431, %v435
      %v438 = vshrl.u32 %v328, 16
      %v440 = vshll.u32 %v328, 16
      %v442 = vrot.slane %v440, 1
      %v443 = vor.u32 %v438, %v442
      %v445 = vshll.u32 %v376, 16
      %v447 = vrot.slane %v445, 1
      %v448 = vsel %vm388, %v443, %v447
      %v450 = vshrl.u32 %v329, 16
      %v452 = vshll.u32 %v329, 16
      %v454 = vrot.slane %v452, 1
      %v455 = vor.u32 %v450, %v454
      %v457 = vshll.u32 %v377, 16
      %v459 = vrot.slane %v457, 1
      %v460 = vsel %vm388, %v455, %v459
      %v462 = vshrl.u32 %v330, 16
      %v464 = vshll.u32 %v330, 16
      %v466 = vrot.slane %v464, 1
      %v467 = vor.u32 %v462, %v466
      %v469 = vshll.u32 %v378, 16
      %v471 = vrot.slane %v469, 1
      %v472 = vsel %vm388, %v467, %v471
      %v474 = vshrl.u32 %v331, 16
      %v476 = vshll.u32 %v331, 16
      %v478 = vrot.slane %v476, 1
      %v479 = vor.u32 %v474, %v478
      %v481 = vshll.u32 %v379, 16
      %v483 = vrot.slane %v481, 1
      %v484 = vsel %vm388, %v479, %v483
      %v486 = vshrl.u32 %v332, 16
      %v488 = vshll.u32 %v332, 16
      %v490 = vrot.slane %v488, 1
      %v491 = vor.u32 %v486, %v490
      %v493 = vshll.u32 %v380, 16
      %v495 = vrot.slane %v493, 1
      %v496 = vsel %vm388, %v491, %v495
      %v498 = vshrl.u32 %v333, 16
      %v500 = vshll.u32 %v333, 16
      %v502 = vrot.slane %v500, 1
      %v503 = vor.u32 %v498, %v502
      %v505 = vshll.u32 %v381, 16
      %v507 = vrot.slane %v505, 1
      %v508 = vsel %vm388, %v503, %v507
      %v510 = vshrl.u32 %v334, 16
      %v512 = vshll.u32 %v334, 16
      %v514 = vrot.slane %v512, 1
      %v515 = vor.u32 %v510, %v514
      %v517 = vshll.u32 %v382, 16
      %v519 = vrot.slane %v517, 1
      %v520 = vsel %vm388, %v515, %v519
      %v522 = vshrl.u32 %v335, 16
      %v524 = vshll.u32 %v335, 16
      %v526 = vrot.slane %v524, 1
      %v527 = vor.u32 %v522, %v526
      %v529 = vshll.u32 %v383, 16
      %v531 = vrot.slane %v529, 1
      %v532 = vsel %vm388, %v527, %v531
      %v534 = vshrl.u32 %v336, 16
      %v536 = vshll.u32 %v336, 16
      %v538 = vrot.slane %v536, 1
      %v539 = vor.u32 %v534, %v538
      %v541 = vshll.u32 %v384, 16
      %v543 = vrot.slane %v541, 1
      %v544 = vsel %vm388, %v539, %v543
      %v546 = vshrl.u32 %v337, 16
      %v548 = vshll.u32 %v337, 16
      %v550 = vrot.slane %v548, 1
      %v551 = vor.u32 %v546, %v550
      %v553 = vshll.u32 %v385, 16
      %v555 = vrot.slane %v553, 1
      %v556 = vsel %vm388, %v551, %v555
      %v558 = vshrl.u32 %v338, 16
      %v560 = vshll.u32 %v338, 16
      %v562 = vrot.slane %v560, 1
      %v563 = vor.u32 %v558, %v562
      %v565 = vshll.u32 %v386, 16
      %v567 = vrot.slane %v565, 1
      %v568 = vsel %vm388, %v563, %v567
      %v570 = vshrl.u32 %v339, 16
      %v572 = vshll.u32 %v339, 16
      %v574 = vrot.slane %v572, 1
      %v575 = vor.u32 %v570, %v574
      %v577 = vshll.u32 %v387, 16
      %v579 = vrot.slane %v577, 1
      %v580 = vsel %vm388, %v575, %v579
      %581 = vrot.lane.b32.xlu0 %v400, 4
      %v582 = vpop.permute.xlu0 %581
      %583 = vrot.lane.b32.xlu0 %v412, 4
      %v584 = vpop.permute.xlu0 %583
      %585 = vrot.lane.b32.xlu0 %v424, 4
      %v586 = vpop.permute.xlu0 %585
      %587 = vrot.lane.b32.xlu0 %v436, 4
      %v588 = vpop.permute.xlu0 %587
      %589 = vrot.lane.b32.xlu0 %v448, 4
      %v590 = vpop.permute.xlu0 %589
      %591 = vrot.lane.b32.xlu0 %v460, 4
      %v592 = vpop.permute.xlu0 %591
      %593 = vrot.lane.b32.xlu0 %v472, 4
      %v594 = vpop.permute.xlu0 %593
      %595 = vrot.lane.b32.xlu0 %v484, 4
      %v596 = vpop.permute.xlu0 %595
      %597 = vrot.lane.b32.xlu0 %v496, 4
      %v598 = vpop.permute.xlu0 %597
      %599 = vrot.lane.b32.xlu0 %v508, 4
      %v600 = vpop.permute.xlu0 %599
      %601 = vrot.lane.b32.xlu0 %v520, 4
      %v602 = vpop.permute.xlu0 %601
      %603 = vrot.lane.b32.xlu0 %v532, 4
      %v604 = vpop.permute.xlu0 %603
      %605 = vrot.lane.b32.xlu0 %v544, 4
      %v606 = vpop.permute.xlu0 %605
      %607 = vrot.lane.b32.xlu0 %v556, 4
      %v608 = vpop.permute.xlu0 %607
      %609 = vrot.lane.b32.xlu0 %v568, 4
      %v610 = vpop.permute.xlu0 %609
      %611 = vrot.lane.b32.xlu0 %v580, 4
      %v612 = vpop.permute.xlu0 %611
      %vm613 = vcmask 1046528
      %v614 = vrot.slane %v324, 1
      %v615 = vrot.slane %v372, 1
      %v616 = vsel %vm613, %v614, %v615
      %v617 = vrot.slane %v325, 1
      %v618 = vrot.slane %v373, 1
      %v619 = vsel %vm613, %v617, %v618
      %v620 = vrot.slane %v326, 1
      %v621 = vrot.slane %v374, 1
      %v622 = vsel %vm613, %v620, %v621
      %v623 = vrot.slane %v327, 1
      %v624 = vrot.slane %v375, 1
      %v625 = vsel %vm613, %v623, %v624
      %v626 = vrot.slane %v328, 1
      %v627 = vrot.slane %v376, 1
      %v628 = vsel %vm613, %v626, %v627
      %v629 = vrot.slane %v329, 1
      %v630 = vrot.slane %v377, 1
      %v631 = vsel %vm613, %v629, %v630
      %v632 = vrot.slane %v330, 1
      %v633 = vrot.slane %v378, 1
      %v634 = vsel %vm613, %v632, %v633
      %v635 = vrot.slane %v331, 1
      %v636 = vrot.slane %v379, 1
      %v637 = vsel %vm613, %v635, %v636
      %v638 = vrot.slane %v332, 1
      %v639 = vrot.slane %v380, 1
      %v640 = vsel %vm613, %v638, %v639
      %v641 = vrot.slane %v333, 1
      %v642 = vrot.slane %v381, 1
      %v643 = vsel %vm613, %v641, %v642
      %v644 = vrot.slane %v334, 1
      %v645 = vrot.slane %v382, 1
      %v646 = vsel %vm613, %v644, %v645
      %v647 = vrot.slane %v335, 1
      %v648 = vrot.slane %v383, 1
      %v649 = vsel %vm613, %v647, %v648
      %v650 = vrot.slane %v336, 1
      %v651 = vrot.slane %v384, 1
      %v652 = vsel %vm613, %v650, %v651
      %v653 = vrot.slane %v337, 1
      %v654 = vrot.slane %v385, 1
      %v655 = vsel %vm613, %v653, %v654
      %v656 = vrot.slane %v338, 1
      %v657 = vrot.slane %v386, 1
      %v658 = vsel %vm613, %v656, %v657
      %v659 = vrot.slane %v339, 1
      %v660 = vrot.slane %v387, 1
      %v661 = vsel %vm613, %v659, %v660
      %662 = vrot.lane.b32.xlu0 %v616, 8
      %v663 = vpop.permute.xlu0 %662
      %664 = vrot.lane.b32.xlu0 %v619, 8
      %v665 = vpop.permute.xlu0 %664
      %666 = vrot.lane.b32.xlu0 %v622, 8
      %v667 = vpop.permute.xlu0 %666
      %668 = vrot.lane.b32.xlu0 %v625, 8
      %v669 = vpop.permute.xlu0 %668
      %670 = vrot.lane.b32.xlu0 %v628, 8
      %v671 = vpop.permute.xlu0 %670
      %672 = vrot.lane.b32.xlu0 %v631, 8
      %v673 = vpop.permute.xlu0 %672
      %674 = vrot.lane.b32.xlu0 %v634, 8
      %v675 = vpop.permute.xlu0 %674
      %676 = vrot.lane.b32.xlu0 %v637, 8
      %v677 = vpop.permute.xlu0 %676
      %678 = vrot.lane.b32.xlu0 %v640, 8
      %v679 = vpop.permute.xlu0 %678
      %680 = vrot.lane.b32.xlu0 %v643, 8
      %v681 = vpop.permute.xlu0 %680
      %682 = vrot.lane.b32.xlu0 %v646, 8
      %v683 = vpop.permute.xlu0 %682
      %684 = vrot.lane.b32.xlu0 %v649, 8
      %v685 = vpop.permute.xlu0 %684
      %686 = vrot.lane.b32.xlu0 %v652, 8
      %v687 = vpop.permute.xlu0 %686
      %688 = vrot.lane.b32.xlu0 %v655, 8
      %v689 = vpop.permute.xlu0 %688
      %690 = vrot.lane.b32.xlu0 %v658, 8
      %v691 = vpop.permute.xlu0 %690
      %692 = vrot.lane.b32.xlu0 %v661, 8
      %v693 = vpop.permute.xlu0 %692
      %v696 = vunpack.c.l.b16 %v254
      %v697 = vunpack.c.l.b16 %v255
      %v698 = vpack.c.b16 %v697, %v696
      %699 = vrot.lane.b32.xlu0 %v325, 12
      %v700 = vpop.permute.xlu0 %699
      %701 = vrot.lane.b32.xlu0 %v326, 12
      %v702 = vpop.permute.xlu0 %701
      %703 = vrot.lane.b32.xlu0 %v327, 12
      %v704 = vpop.permute.xlu0 %703
      %705 = vrot.lane.b32.xlu0 %v328, 12
      %v706 = vpop.permute.xlu0 %705
      %707 = vrot.lane.b32.xlu0 %v329, 12
      %v708 = vpop.permute.xlu0 %707
      %709 = vrot.lane.b32.xlu0 %v330, 12
      %v710 = vpop.permute.xlu0 %709
      %711 = vrot.lane.b32.xlu0 %v331, 12
      %v712 = vpop.permute.xlu0 %711
      %713 = vrot.lane.b32.xlu0 %v332, 12
      %v714 = vpop.permute.xlu0 %713
      %715 = vrot.lane.b32.xlu0 %v333, 12
      %v716 = vpop.permute.xlu0 %715
      %717 = vrot.lane.b32.xlu0 %v334, 12
      %v718 = vpop.permute.xlu0 %717
      %719 = vrot.lane.b32.xlu0 %v335, 12
      %v720 = vpop.permute.xlu0 %719
      %721 = vrot.lane.b32.xlu0 %v336, 12
      %v722 = vpop.permute.xlu0 %721
      %723 = vrot.lane.b32.xlu0 %v337, 12
      %v724 = vpop.permute.xlu0 %723
      %725 = vrot.lane.b32.xlu0 %v338, 12
      %v726 = vpop.permute.xlu0 %725
      %727 = vrot.lane.b32.xlu0 %v339, 12
      %v728 = vpop.permute.xlu0 %727
      %729 = vrot.lane.b32.xlu0 %v698, 12
      %v730 = vpop.permute.xlu0 %729
      %v732 = vunpack.c.l.b16 %v256
      %v733 = vpack.c.b16 %v732, %v732
      %v735 = vshrl.u32 %v698, 16
      %v737 = vshll.u32 %v698, 16
      %v739 = vrot.slane %v737, 1
      %v740 = vor.u32 %v735, %v739
      %v742 = vshll.u32 %v733, 16
      %v744 = vrot.slane %v742, 1
      %v745 = vsel %vm388, %v740, %v744
      %746 = vrot.lane.b32.xlu0 %v412, 16
      %v747 = vpop.permute.xlu0 %746
      %748 = vrot.lane.b32.xlu0 %v424, 16
      %v749 = vpop.permute.xlu0 %748
      %750 = vrot.lane.b32.xlu0 %v436, 16
      %v751 = vpop.permute.xlu0 %750
      %752 = vrot.lane.b32.xlu0 %v448, 16
      %v753 = vpop.permute.xlu0 %752
      %754 = vrot.lane.b32.xlu0 %v460, 16
      %v755 = vpop.permute.xlu0 %754
      %756 = vrot.lane.b32.xlu0 %v472, 16
      %v757 = vpop.permute.xlu0 %756
      %758 = vrot.lane.b32.xlu0 %v484, 16
      %v759 = vpop.permute.xlu0 %758
      %760 = vrot.lane.b32.xlu0 %v496, 16
      %v761 = vpop.permute.xlu0 %760
      %762 = vrot.lane.b32.xlu0 %v508, 16
      %v763 = vpop.permute.xlu0 %762
      %764 = vrot.lane.b32.xlu0 %v520, 16
      %v765 = vpop.permute.xlu0 %764
      %766 = vrot.lane.b32.xlu0 %v532, 16
      %v767 = vpop.permute.xlu0 %766
      %768 = vrot.lane.b32.xlu0 %v544, 16
      %v769 = vpop.permute.xlu0 %768
      %770 = vrot.lane.b32.xlu0 %v556, 16
      %v771 = vpop.permute.xlu0 %770
      %772 = vrot.lane.b32.xlu0 %v568, 16
      %v773 = vpop.permute.xlu0 %772
      %774 = vrot.lane.b32.xlu0 %v580, 16
      %v775 = vpop.permute.xlu0 %774
      %776 = vrot.lane.b32.xlu0 %v745, 16
      %v777 = vpop.permute.xlu0 %776
      %v778 = vrot.slane %v698, 1
      %v779 = vrot.slane %v733, 1
      %v780 = vsel %vm613, %v778, %v779
      %781 = vrot.lane.b32.xlu0 %v619, 20
      %v782 = vpop.permute.xlu0 %781
      %783 = vrot.lane.b32.xlu0 %v622, 20
      %v784 = vpop.permute.xlu0 %783
      %785 = vrot.lane.b32.xlu0 %v625, 20
      %v786 = vpop.permute.xlu0 %785
      %787 = vrot.lane.b32.xlu0 %v628, 20
      %v788 = vpop.permute.xlu0 %787
      %789 = vrot.lane.b32.xlu0 %v631, 20
      %v790 = vpop.permute.xlu0 %789
      %791 = vrot.lane.b32.xlu0 %v634, 20
      %v792 = vpop.permute.xlu0 %791
      %793 = vrot.lane.b32.xlu0 %v637, 20
      %v794 = vpop.permute.xlu0 %793
      %795 = vrot.lane.b32.xlu0 %v640, 20
      %v796 = vpop.permute.xlu0 %795
      %797 = vrot.lane.b32.xlu0 %v643, 20
      %v798 = vpop.permute.xlu0 %797
      %799 = vrot.lane.b32.xlu0 %v646, 20
      %v800 = vpop.permute.xlu0 %799
      %801 = vrot.lane.b32.xlu0 %v649, 20
      %v802 = vpop.permute.xlu0 %801
      %803 = vrot.lane.b32.xlu0 %v652, 20
      %v804 = vpop.permute.xlu0 %803
      %805 = vrot.lane.b32.xlu0 %v655, 20
      %v806 = vpop.permute.xlu0 %805
      %807 = vrot.lane.b32.xlu0 %v658, 20
      %v808 = vpop.permute.xlu0 %807
      %809 = vrot.lane.b32.xlu0 %v661, 20
      %v810 = vpop.permute.xlu0 %809
      %811 = vrot.lane.b32.xlu0 %v780, 20
      %v812 = vpop.permute.xlu0 %811
      %v815 = vunpack.c.l.b16 %v257
      %v816 = vunpack.c.l.b16 %v258
      %v817 = vpack.c.b16 %v816, %v815
      %818 = vrot.lane.b32.xlu0 %v326, 24
      %v819 = vpop.permute.xlu0 %818
      %820 = vrot.lane.b32.xlu0 %v327, 24
      %v821 = vpop.permute.xlu0 %820
      %822 = vrot.lane.b32.xlu0 %v328, 24
      %v823 = vpop.permute.xlu0 %822
      %824 = vrot.lane.b32.xlu0 %v329, 24
      %v825 = vpop.permute.xlu0 %824
      %826 = vrot.lane.b32.xlu0 %v330, 24
      %v827 = vpop.permute.xlu0 %826
      %828 = vrot.lane.b32.xlu0 %v331, 24
      %v829 = vpop.permute.xlu0 %828
      %830 = vrot.lane.b32.xlu0 %v332, 24
      %v831 = vpop.permute.xlu0 %830
      %832 = vrot.lane.b32.xlu0 %v333, 24
      %v833 = vpop.permute.xlu0 %832
      %834 = vrot.lane.b32.xlu0 %v334, 24
      %v835 = vpop.permute.xlu0 %834
      %836 = vrot.lane.b32.xlu0 %v335, 24
      %v837 = vpop.permute.xlu0 %836
      %838 = vrot.lane.b32.xlu0 %v336, 24
      %v839 = vpop.permute.xlu0 %838
      %840 = vrot.lane.b32.xlu0 %v337, 24
      %v841 = vpop.permute.xlu0 %840
      %842 = vrot.lane.b32.xlu0 %v338, 24
      %v843 = vpop.permute.xlu0 %842
      %844 = vrot.lane.b32.xlu0 %v339, 24
      %v845 = vpop.permute.xlu0 %844
      %846 = vrot.lane.b32.xlu0 %v698, 24
      %v847 = vpop.permute.xlu0 %846
      %848 = vrot.lane.b32.xlu0 %v817, 24
      %v849 = vpop.permute.xlu0 %848
      %v851 = vunpack.c.l.b16 %v259
      %v852 = vpack.c.b16 %v851, %v851
      %v854 = vshrl.u32 %v817, 16
      %v856 = vshll.u32 %v817, 16
      %v858 = vrot.slane %v856, 1
      %v859 = vor.u32 %v854, %v858
      %v861 = vshll.u32 %v852, 16
      %v863 = vrot.slane %v861, 1
      %v864 = vsel %vm388, %v859, %v863
      %865 = vrot.lane.b32.xlu0 %v424, 28
      %v866 = vpop.permute.xlu0 %865
      %867 = vrot.lane.b32.xlu0 %v436, 28
      %v868 = vpop.permute.xlu0 %867
      %869 = vrot.lane.b32.xlu0 %v448, 28
      %v870 = vpop.permute.xlu0 %869
      %871 = vrot.lane.b32.xlu0 %v460, 28
      %v872 = vpop.permute.xlu0 %871
      %873 = vrot.lane.b32.xlu0 %v472, 28
      %v874 = vpop.permute.xlu0 %873
      %875 = vrot.lane.b32.xlu0 %v484, 28
      %v876 = vpop.permute.xlu0 %875
      %877 = vrot.lane.b32.xlu0 %v496, 28
      %v878 = vpop.permute.xlu0 %877
      %879 = vrot.lane.b32.xlu0 %v508, 28
      %v880 = vpop.permute.xlu0 %879
      %881 = vrot.lane.b32.xlu0 %v520, 28
      %v882 = vpop.permute.xlu0 %881
      %883 = vrot.lane.b32.xlu0 %v532, 28
      %v884 = vpop.permute.xlu0 %883
      %885 = vrot.lane.b32.xlu0 %v544, 28
      %v886 = vpop.permute.xlu0 %885
      %887 = vrot.lane.b32.xlu0 %v556, 28
      %v888 = vpop.permute.xlu0 %887
      %889 = vrot.lane.b32.xlu0 %v568, 28
      %v890 = vpop.permute.xlu0 %889
      %891 = vrot.lane.b32.xlu0 %v580, 28
      %v892 = vpop.permute.xlu0 %891
      %893 = vrot.lane.b32.xlu0 %v745, 28
      %v894 = vpop.permute.xlu0 %893
      %895 = vrot.lane.b32.xlu0 %v864, 28
      %v896 = vpop.permute.xlu0 %895
      %v897 = vrot.slane %v817, 1
      %v898 = vrot.slane %v852, 1
      %v899 = vsel %vm613, %v897, %v898
      %900 = vrot.lane.b32.xlu0 %v622, 32
      %v901 = vpop.permute.xlu0 %900
      %902 = vrot.lane.b32.xlu0 %v625, 32
      %v903 = vpop.permute.xlu0 %902
      %904 = vrot.lane.b32.xlu0 %v628, 32
      %v905 = vpop.permute.xlu0 %904
      %906 = vrot.lane.b32.xlu0 %v631, 32
      %v907 = vpop.permute.xlu0 %906
      %908 = vrot.lane.b32.xlu0 %v634, 32
      %v909 = vpop.permute.xlu0 %908
      %910 = vrot.lane.b32.xlu0 %v637, 32
      %v911 = vpop.permute.xlu0 %910
      %912 = vrot.lane.b32.xlu0 %v640, 32
      %v913 = vpop.permute.xlu0 %912
      %914 = vrot.lane.b32.xlu0 %v643, 32
      %v915 = vpop.permute.xlu0 %914
      %916 = vrot.lane.b32.xlu0 %v646, 32
      %v917 = vpop.permute.xlu0 %916
      %918 = vrot.lane.b32.xlu0 %v649, 32
      %v919 = vpop.permute.xlu0 %918
      %920 = vrot.lane.b32.xlu0 %v652, 32
      %v921 = vpop.permute.xlu0 %920
      %922 = vrot.lane.b32.xlu0 %v655, 32
      %v923 = vpop.permute.xlu0 %922
      %924 = vrot.lane.b32.xlu0 %v658, 32
      %v925 = vpop.permute.xlu0 %924
      %926 = vrot.lane.b32.xlu0 %v661, 32
      %v927 = vpop.permute.xlu0 %926
      %928 = vrot.lane.b32.xlu0 %v780, 32
      %v929 = vpop.permute.xlu0 %928
      %930 = vrot.lane.b32.xlu0 %v899, 32
      %v931 = vpop.permute.xlu0 %930
      %vm932 = vcmask 31744
      %v934 = vsel %vm932, %v324, %v582
      %v936 = vsel %vm932, %v325, %v584
      %v938 = vsel %vm932, %v326, %v586
      %v940 = vsel %vm932, %v327, %v588
      %v942 = vsel %vm932, %v328, %v590
      %v944 = vsel %vm932, %v329, %v592
      %v946 = vsel %vm932, %v330, %v594
      %v948 = vsel %vm932, %v331, %v596
      %v950 = vsel %vm932, %v332, %v598
      %v952 = vsel %vm932, %v333, %v600
      %v954 = vsel %vm932, %v334, %v602
      %v956 = vsel %vm932, %v335, %v604
      %v958 = vsel %vm932, %v336, %v606
      %v960 = vsel %vm932, %v337, %v608
      %v962 = vsel %vm932, %v338, %v610
      %v964 = vsel %vm932, %v339, %v612
      %vm965 = vcmask 64512
      %v967 = vsel %vm965, %v934, %v663
      %v969 = vsel %vm965, %v936, %v665
      %v971 = vsel %vm965, %v938, %v667
      %v973 = vsel %vm965, %v940, %v669
      %v975 = vsel %vm965, %v942, %v671
      %v977 = vsel %vm965, %v944, %v673
      %v979 = vsel %vm965, %v946, %v675
      %v981 = vsel %vm965, %v948, %v677
      %v983 = vsel %vm965, %v950, %v679
      %v985 = vsel %vm965, %v952, %v681
      %v987 = vsel %vm965, %v954, %v683
      %v989 = vsel %vm965, %v956, %v685
      %v991 = vsel %vm965, %v958, %v687
      %v993 = vsel %vm965, %v960, %v689
      %v995 = vsel %vm965, %v962, %v691
      %v997 = vsel %vm965, %v964, %v693
      %vm998 = vcmask 97280
      %v1000 = vsel %vm998, %v967, %v700
      %v1002 = vsel %vm998, %v969, %v702
      %v1004 = vsel %vm998, %v971, %v704
      %v1006 = vsel %vm998, %v973, %v706
      %v1008 = vsel %vm998, %v975, %v708
      %v1010 = vsel %vm998, %v977, %v710
      %v1012 = vsel %vm998, %v979, %v712
      %v1014 = vsel %vm998, %v981, %v714
      %v1016 = vsel %vm998, %v983, %v716
      %v1018 = vsel %vm998, %v985, %v718
      %v1020 = vsel %vm998, %v987, %v720
      %v1022 = vsel %vm998, %v989, %v722
      %v1024 = vsel %vm998, %v991, %v724
      %v1026 = vsel %vm998, %v993, %v726
      %v1028 = vsel %vm998, %v995, %v728
      %v1030 = vsel %vm998, %v997, %v730
      %vm1031 = vcmask 130048
      %v1033 = vsel %vm1031, %v1000, %v747
      %v1035 = vsel %vm1031, %v1002, %v749
      %v1037 = vsel %vm1031, %v1004, %v751
      %v1039 = vsel %vm1031, %v1006, %v753
      %v1041 = vsel %vm1031, %v1008, %v755
      %v1043 = vsel %vm1031, %v1010, %v757
      %v1045 = vsel %vm1031, %v1012, %v759
      %v1047 = vsel %vm1031, %v1014, %v761
      %v1049 = vsel %vm1031, %v1016, %v763
      %v1051 = vsel %vm1031, %v1018, %v765
      %v1053 = vsel %vm1031, %v1020, %v767
      %v1055 = vsel %vm1031, %v1022, %v769
      %v1057 = vsel %vm1031, %v1024, %v771
      %v1059 = vsel %vm1031, %v1026, %v773
      %v1061 = vsel %vm1031, %v1028, %v775
      %v1063 = vsel %vm1031, %v1030, %v777
      %vm1064 = vcmask 162816
      %v1066 = vsel %vm1064, %v1033, %v782
      %v1068 = vsel %vm1064, %v1035, %v784
      %v1070 = vsel %vm1064, %v1037, %v786
      %v1072 = vsel %vm1064, %v1039, %v788
      %v1074 = vsel %vm1064, %v1041, %v790
      %v1076 = vsel %vm1064, %v1043, %v792
      %v1078 = vsel %vm1064, %v1045, %v794
      %v1080 = vsel %vm1064, %v1047, %v796
      %v1082 = vsel %vm1064, %v1049, %v798
      %v1084 = vsel %vm1064, %v1051, %v800
      %v1086 = vsel %vm1064, %v1053, %v802
      %v1088 = vsel %vm1064, %v1055, %v804
      %v1090 = vsel %vm1064, %v1057, %v806
      %v1092 = vsel %vm1064, %v1059, %v808
      %v1094 = vsel %vm1064, %v1061, %v810
      %v1096 = vsel %vm1064, %v1063, %v812
      %vm1097 = vcmask 195584
      %v1099 = vsel %vm1097, %v1066, %v819
      %v1101 = vsel %vm1097, %v1068, %v821
      %v1103 = vsel %vm1097, %v1070, %v823
      %v1105 = vsel %vm1097, %v1072, %v825
      %v1107 = vsel %vm1097, %v1074, %v827
      %v1109 = vsel %vm1097, %v1076, %v829
      %v1111 = vsel %vm1097, %v1078, %v831
      %v1113 = vsel %vm1097, %v1080, %v833
      %v1115 = vsel %vm1097, %v1082, %v835
      %v1117 = vsel %vm1097, %v1084, %v837
      %v1119 = vsel %vm1097, %v1086, %v839
      %v1121 = vsel %vm1097, %v1088, %v841
      %v1123 = vsel %vm1097, %v1090, %v843
      %v1125 = vsel %vm1097, %v1092, %v845
      %v1127 = vsel %vm1097, %v1094, %v847
      %v1129 = vsel %vm1097, %v1096, %v849
      %vm1130 = vcmask 228352
      %v1132 = vsel %vm1130, %v1099, %v866
      %v1134 = vsel %vm1130, %v1101, %v868
      %v1136 = vsel %vm1130, %v1103, %v870
      %v1138 = vsel %vm1130, %v1105, %v872
      %v1140 = vsel %vm1130, %v1107, %v874
      %v1142 = vsel %vm1130, %v1109, %v876
      %v1144 = vsel %vm1130, %v1111, %v878
      %v1146 = vsel %vm1130, %v1113, %v880
      %v1148 = vsel %vm1130, %v1115, %v882
      %v1150 = vsel %vm1130, %v1117, %v884
      %v1152 = vsel %vm1130, %v1119, %v886
      %v1154 = vsel %vm1130, %v1121, %v888
      %v1156 = vsel %vm1130, %v1123, %v890
      %v1158 = vsel %vm1130, %v1125, %v892
      %v1160 = vsel %vm1130, %v1127, %v894
      %v1162 = vsel %vm1130, %v1129, %v896
      %vm1163 = vcmask 261120
      %v1165 = vsel %vm1163, %v1132, %v901
      %v1167 = vsel %vm1163, %v1134, %v903
      %v1169 = vsel %vm1163, %v1136, %v905
      %v1171 = vsel %vm1163, %v1138, %v907
      %v1173 = vsel %vm1163, %v1140, %v909
      %v1175 = vsel %vm1163, %v1142, %v911
      %v1177 = vsel %vm1163, %v1144, %v913
      %v1179 = vsel %vm1163, %v1146, %v915
      %v1181 = vsel %vm1163, %v1148, %v917
      %v1183 = vsel %vm1163, %v1150, %v919
      %v1185 = vsel %vm1163, %v1152, %v921
      %v1187 = vsel %vm1163, %v1154, %v923
      %v1189 = vsel %vm1163, %v1156, %v925
      %v1191 = vsel %vm1163, %v1158, %v927
      %v1193 = vsel %vm1163, %v1160, %v929
      %v1195 = vsel %vm1163, %v1162, %v931
      %vm1196 = vcmask 293888
      %v1198 = vsel %vm1196, %v1165, 0
      %v1200 = vsel %vm1196, %v1167, 0
      %v1202 = vsel %vm1196, %v1169, 0
      %v1204 = vsel %vm1196, %v1171, 0
      %v1206 = vsel %vm1196, %v1173, 0
      %v1208 = vsel %vm1196, %v1175, 0
      %v1210 = vsel %vm1196, %v1177, 0
      %v1212 = vsel %vm1196, %v1179, 0
      %v1214 = vsel %vm1196, %v1181, 0
      %v1216 = vsel %vm1196, %v1183, 0
      %v1218 = vsel %vm1196, %v1185, 0
      %v1220 = vsel %vm1196, %v1187, 0
      %v1222 = vsel %vm1196, %v1189, 0
      %v1224 = vsel %vm1196, %v1191, 0
      %v1226 = vsel %vm1196, %v1193, 0
      %v1228 = vsel %vm1196, %v1195, 0
      %v1230 = vld [vmem:[%s1] sm:$0xf]
      %v1231 = vld [vmem:[%s1 + $0x4] sm:$0xf]
      %v1232 = vld [vmem:[%s1 + $0x8] sm:$0xf]
      %v1233 = vld [vmem:[%s1 + $0xc] sm:$0xf]
      %v1234 = vld [vmem:[%s1 + $0x10] sm:$0xf]
      %v1235 = vld [vmem:[%s1 + $0x14] sm:$0xf]
      %v1236 = vld [vmem:[%s1 + $0x18] sm:$0xf]
      %v1237 = vld [vmem:[%s1 + $0x1c] sm:$0xf]
      %v1238 = vld [vmem:[%s1 + $0x20] sm:$0xf]
      %v1239 = vld [vmem:[%s1 + $0x24] sm:$0xf]
      %v1240 = vld [vmem:[%s1 + $0x28] sm:$0xf]
      %v1241 = vld [vmem:[%s1 + $0x2c] sm:$0xf]
      %v1242 = vld [vmem:[%s1 + $0x30] sm:$0xf]
      %v1243 = vld [vmem:[%s1 + $0x34] sm:$0xf]
      %v1244 = vld [vmem:[%s1 + $0x38] sm:$0xf]
      %v1245 = vld [vmem:[%s1 + $0x3c] sm:$0xf]
      %v1262 = vunpack.c.l.b16 %v1230
      %v1263 = vunpack.c.l.b16 %v1231
      %v1264 = vunpack.c.l.b16 %v1232
      %v1265 = vunpack.c.l.b16 %v1233
      %v1266 = vunpack.c.l.b16 %v1234
      %v1267 = vunpack.c.l.b16 %v1235
      %v1268 = vunpack.c.l.b16 %v1236
      %v1269 = vunpack.c.l.b16 %v1237
      %v1270 = vunpack.c.l.b16 %v1238
      %v1271 = vunpack.c.l.b16 %v1239
      %v1272 = vunpack.c.l.b16 %v1240
      %v1273 = vunpack.c.l.b16 %v1241
      %v1274 = vunpack.c.l.b16 %v1242
      %v1275 = vunpack.c.l.b16 %v1243
      %v1276 = vunpack.c.l.b16 %v1244
      %v1277 = vunpack.c.l.b16 %v1245
      %v1278 = vpack.c.b16 %v1263, %v1262
      %v1279 = vpack.c.b16 %v1265, %v1264
      %v1280 = vpack.c.b16 %v1267, %v1266
      %v1281 = vpack.c.b16 %v1269, %v1268
      %v1282 = vpack.c.b16 %v1271, %v1270
      %v1283 = vpack.c.b16 %v1273, %v1272
      %v1284 = vpack.c.b16 %v1275, %v1274
      %v1285 = vpack.c.b16 %v1277, %v1276
      %1294 = vmatprep.subr.bf16.mxu0 0
      %1295 = vmatpush1.bf16.msra.mxu0 %v1278
      %1296 = vmatprep.subr.bf16.mxu0 0
      %1297 = vmatpush1.bf16.msra.mxu0 %v1279
      %1298 = vmatprep.subr.bf16.mxu0 0
      %1299 = vmatpush1.bf16.msra.mxu0 %v1280
      %1300 = vmatprep.subr.bf16.mxu0 0
      %1301 = vmatpush1.bf16.msra.mxu0 %v1281
      %1302 = vmatprep.subr.bf16.mxu0 0
      %1303 = vmatpush1.bf16.msra.mxu0 %v1282
      %1304 = vmatprep.subr.bf16.mxu0 0
      %1305 = vmatpush1.bf16.msra.mxu0 %v1283
      %1306 = vmatprep.subr.bf16.mxu0 0
      %1307 = vmatpush1.bf16.msra.mxu0 %v1284
      %1308 = vmatprep.subr.bf16.mxu0 0
      %1309 = vmatpush1.bf16.msra.mxu0 %v1285
      %1310 = vmatprep.subr.bf16.mxu0 0
      %1311 = vmatpush1.bf16.msra.mxu0 0
      %1312 = vmatprep.subr.bf16.mxu0 0
      %1313 = vmatpush1.bf16.msra.mxu0 0
      %1314 = vmatprep.subr.bf16.mxu0 0
      %1315 = vmatpush1.bf16.msra.mxu0 0
      %1316 = vmatprep.subr.bf16.mxu0 0
      %1317 = vmatpush1.bf16.msra.mxu0 0
      %1318 = vmatprep.subr.bf16.mxu0 0
      %1319 = vmatpush1.bf16.msra.mxu0 0
      %1320 = vmatprep.subr.bf16.mxu0 0
      %1321 = vmatpush1.bf16.msra.mxu0 0
      %1322 = vmatprep.subr.bf16.mxu0 0
      %1323 = vmatpush1.bf16.msra.mxu0 0
      %1324 = vmatprep.subr.bf16.mxu0 0
      %1325 = vmatpush1.bf16.msra.mxu0 0
      %1326 = vmatprep.mubr.bf16.mxu0 0
      %1327 = vmatmul.mubr.bf16.gmra.mrb[0].mxu0 %v1198
      %v1328 = vpop.f32.mrb[0].mxu0
      %v1329 = vadd.f32 0.0, %v1328
      %v1330 = vpop.f32.mrb[0].mxu0
      %v1331 = vpop.f32.mrb[0].mxu0
      %v1332 = vadd.f32 0.0, %v1331
      %v1333 = vpop.f32.mrb[0].mxu0
      %1334 = vmatprep.mubr.bf16.mxu0 0
      %1335 = vmatmul.mubr.bf16.gmra.mrb[0].mxu0 %v1200
      %v1336 = vpop.f32.mrb[0].mxu0
      %v1337 = vadd.f32 0.0, %v1336
      %v1338 = vpop.f32.mrb[0].mxu0
      %v1339 = vpop.f32.mrb[0].mxu0
      %v1340 = vadd.f32 0.0, %v1339
      %v1341 = vpop.f32.mrb[0].mxu0
      %1342 = vmatprep.mubr.bf16.mxu0 0
      %1343 = vmatmul.mubr.bf16.gmra.mrb[0].mxu0 %v1202
      %v1344 = vpop.f32.mrb[0].mxu0
      %v1345 = vadd.f32 0.0, %v1344
      %v1346 = vpop.f32.mrb[0].mxu0
      %v1347 = vpop.f32.mrb[0].mxu0
      %v1348 = vadd.f32 0.0, %v1347
      %v1349 = vpop.f32.mrb[0].mxu0
      %1350 = vmatprep.mubr.bf16.mxu0 0
      %1351 = vmatmul.mubr.bf16.gmra.mrb[0].mxu0 %v1204
      %v1352 = vpop.f32.mrb[0].mxu0
      %v1353 = vadd.f32 0.0, %v1352
      %v1354 = vpop.f32.mrb[0].mxu0
      %v1355 = vpop.f32.mrb[0].mxu0
      %v1356 = vadd.f32 0.0, %v1355
      %v1357 = vpop.f32.mrb[0].mxu0
      %1358 = vmatprep.mubr.bf16.mxu0 0
      %1359 = vmatmul.mubr.bf16.gmra.mrb[0].mxu0 %v1206
      %v1360 = vpop.f32.mrb[0].mxu0
      %v1361 = vadd.f32 0.0, %v1360
      %v1362 = vpop.f32.mrb[0].mxu0
      %v1363 = vpop.f32.mrb[0].mxu0
      %v1364 = vadd.f32 0.0, %v1363
      %v1365 = vpop.f32.mrb[0].mxu0
      %1366 = vmatprep.mubr.bf16.mxu0 0
      %1367 = vmatmul.mubr.bf16.gmra.mrb[0].mxu0 %v1208
      %v1368 = vpop.f32.mrb[0].mxu0
      %v1369 = vadd.f32 0.0, %v1368
      %v1370 = vpop.f32.mrb[0].mxu0
      %v1371 = vpop.f32.mrb[0].mxu0
      %v1372 = vadd.f32 0.0, %v1371
      %v1373 = vpop.f32.mrb[0].mxu0
      %1374 = vmatprep.mubr.bf16.mxu0 0
      %1375 = vmatmul.mubr.bf16.gmra.mrb[0].mxu0 %v1210
      %v1376 = vpop.f32.mrb[0].mxu0
      %v1377 = vadd.f32 0.0, %v1376
      %v1378 = vpop.f32.mrb[0].mxu0
      %v1379 = vpop.f32.mrb[0].mxu0
      %v1380 = vadd.f32 0.0, %v1379
      %v1381 = vpop.f32.mrb[0].mxu0
      %1382 = vmatprep.mubr.bf16.mxu0 0
      %1383 = vmatmul.mubr.bf16.gmra.mrb[0].mxu0 %v1212
      %v1384 = vpop.f32.mrb[0].mxu0
      %v1385 = vadd.f32 0.0, %v1384
      %v1386 = vpop.f32.mrb[0].mxu0
      %v1387 = vpop.f32.mrb[0].mxu0
      %v1388 = vadd.f32 0.0, %v1387
      %v1389 = vpop.f32.mrb[0].mxu0
      %1390 = vmatprep.mubr.bf16.mxu0 0
      %1391 = vmatmul.mubr.bf16.gmra.mrb[0].mxu0 %v1214
      %v1392 = vpop.f32.mrb[0].mxu0
      %v1393 = vadd.f32 0.0, %v1392
      %v1394 = vpop.f32.mrb[0].mxu0
      %v1395 = vpop.f32.mrb[0].mxu0
      %v1396 = vadd.f32 0.0, %v1395
      %v1397 = vpop.f32.mrb[0].mxu0
      %1398 = vmatprep.mubr.bf16.mxu0 0
      %1399 = vmatmul.mubr.bf16.gmra.mrb[0].mxu0 %v1216
      %v1400 = vpop.f32.mrb[0].mxu0
      %v1401 = vadd.f32 0.0, %v1400
      %v1402 = vpop.f32.mrb[0].mxu0
      %v1403 = vpop.f32.mrb[0].mxu0
      %v1404 = vadd.f32 0.0, %v1403
      %v1405 = vpop.f32.mrb[0].mxu0
      %1406 = vmatprep.mubr.bf16.mxu0 0
      %1407 = vmatmul.mubr.bf16.gmra.mrb[0].mxu0 %v1218
      %v1408 = vpop.f32.mrb[0].mxu0
      %v1409 = vadd.f32 0.0, %v1408
      %v1410 = vpop.f32.mrb[0].mxu0
      %v1411 = vpop.f32.mrb[0].mxu0
      %v1412 = vadd.f32 0.0, %v1411
      %v1413 = vpop.f32.mrb[0].mxu0
      %1414 = vmatprep.mubr.bf16.mxu0 0
      %1415 = vmatmul.mubr.bf16.gmra.mrb[0].mxu0 %v1220
      %v1416 = vpop.f32.mrb[0].mxu0
      %v1417 = vadd.f32 0.0, %v1416
      %v1418 = vpop.f32.mrb[0].mxu0
      %v1419 = vpop.f32.mrb[0].mxu0
      %v1420 = vadd.f32 0.0, %v1419
      %v1421 = vpop.f32.mrb[0].mxu0
      %1422 = vmatprep.mubr.bf16.mxu0 0
      %1423 = vmatmul.mubr.bf16.gmra.mrb[0].mxu0 %v1222
      %v1424 = vpop.f32.mrb[0].mxu0
      %v1425 = vadd.f32 0.0, %v1424
      %v1426 = vpop.f32.mrb[0].mxu0
      %v1427 = vpop.f32.mrb[0].mxu0
      %v1428 = vadd.f32 0.0, %v1427
      %v1429 = vpop.f32.mrb[0].mxu0
      %1430 = vmatprep.mubr.bf16.mxu0 0
      %1431 = vmatmul.mubr.bf16.gmra.mrb[0].mxu0 %v1224
      %v1432 = vpop.f32.mrb[0].mxu0
      %v1433 = vadd.f32 0.0, %v1432
      %v1434 = vpop.f32.mrb[0].mxu0
      %v1435 = vpop.f32.mrb[0].mxu0
      %v1436 = vadd.f32 0.0, %v1435
      %v1437 = vpop.f32.mrb[0].mxu0
      %1438 = vmatprep.mubr.bf16.mxu0 0
      %1439 = vmatmul.mubr.bf16.gmra.mrb[0].mxu0 %v1226
      %v1440 = vpop.f32.mrb[0].mxu0
      %v1441 = vadd.f32 0.0, %v1440
      %v1442 = vpop.f32.mrb[0].mxu0
      %v1443 = vpop.f32.mrb[0].mxu0
      %v1444 = vadd.f32 0.0, %v1443
      %v1445 = vpop.f32.mrb[0].mxu0
      %1446 = vmatprep.mubr.bf16.mxu0 0
      %1447 = vmatmul.mubr.bf16.gmra.mrb[0].mxu0 %v1228
      %v1448 = vpop.f32.mrb[0].mxu0
      %v1449 = vadd.f32 0.0, %v1448
      %v1450 = vpop.f32.mrb[0].mxu0
      %v1451 = vpop.f32.mrb[0].mxu0
      %v1452 = vadd.f32 0.0, %v1451
      %v1453 = vpop.f32.mrb[0].mxu0
      %1454 = vdwg.mxu0
      %v1455 = vadd.f32 %v1329, %v1332
      %v1456 = vadd.f32 %v1455, %v1337
      %v1457 = vadd.f32 %v1456, %v1340
      %v1458 = vadd.f32 %v1457, %v1345
      %v1459 = vadd.f32 %v1458, %v1348
      %v1460 = vadd.f32 %v1459, %v1353
      %v1461 = vadd.f32 %v1460, %v1356
      %v1462 = vadd.f32 %v1461, %v1361
      %v1463 = vadd.f32 %v1462, %v1364
      %v1464 = vadd.f32 %v1463, %v1369
      %v1465 = vadd.f32 %v1464, %v1372
      %v1466 = vadd.f32 %v1465, %v1377
      %v1467 = vadd.f32 %v1466, %v1380
      %v1468 = vadd.f32 %v1467, %v1385
      %v1469 = vadd.f32 %v1468, %v1388
      %v1470 = vadd.f32 %v1469, %v1393
      %v1471 = vadd.f32 %v1470, %v1396
      %v1472 = vadd.f32 %v1471, %v1401
      %v1473 = vadd.f32 %v1472, %v1404
      %v1474 = vadd.f32 %v1473, %v1409
      %v1475 = vadd.f32 %v1474, %v1412
      %v1476 = vadd.f32 %v1475, %v1417
      %v1477 = vadd.f32 %v1476, %v1420
      %v1478 = vadd.f32 %v1477, %v1425
      %v1479 = vadd.f32 %v1478, %v1428
      %v1480 = vadd.f32 %v1479, %v1433
      %v1481 = vadd.f32 %v1480, %v1436
      %v1482 = vadd.f32 %v1481, %v1441
      %v1483 = vadd.f32 %v1482, %v1444
      %v1484 = vadd.f32 %v1483, %v1449
      %v1485 = vadd.f32 %v1484, %v1452
      %v1486 = vrot.slane %v1485, 4
      %v1487 = vadd.f32 %v1485, %v1486
      %v1488 = vrot.slane %v1487, 2
      %v1489 = vadd.f32 %v1487, %v1488
      %v1490 = vrot.slane %v1489, 1
      %v1491 = vadd.f32 %v1489, %v1490
      %1492 = vst [vmem:[%s198] sm:$0x1] %v1491
      %v1493 = vmul.f32 %v1329, %v1329
      %v1494 = vmul.f32 %v1332, %v1332
      %v1495 = vmul.f32 %v1337, %v1337
      %v1496 = vmul.f32 %v1340, %v1340
      %v1497 = vmul.f32 %v1345, %v1345
      %v1498 = vmul.f32 %v1348, %v1348
      %v1499 = vmul.f32 %v1353, %v1353
      %v1500 = vmul.f32 %v1356, %v1356
      %v1501 = vmul.f32 %v1361, %v1361
      %v1502 = vmul.f32 %v1364, %v1364
      %v1503 = vmul.f32 %v1369, %v1369
      %v1504 = vmul.f32 %v1372, %v1372
      %v1505 = vmul.f32 %v1377, %v1377
      %v1506 = vmul.f32 %v1380, %v1380
      %v1507 = vmul.f32 %v1385, %v1385
      %v1508 = vmul.f32 %v1388, %v1388
      %v1509 = vmul.f32 %v1393, %v1393
      %v1510 = vmul.f32 %v1396, %v1396
      %v1511 = vmul.f32 %v1401, %v1401
      %v1512 = vmul.f32 %v1404, %v1404
      %v1513 = vmul.f32 %v1409, %v1409
      %v1514 = vmul.f32 %v1412, %v1412
      %v1515 = vmul.f32 %v1417, %v1417
      %v1516 = vmul.f32 %v1420, %v1420
      %v1517 = vmul.f32 %v1425, %v1425
      %v1518 = vmul.f32 %v1428, %v1428
      %v1519 = vmul.f32 %v1433, %v1433
      %v1520 = vmul.f32 %v1436, %v1436
      %v1521 = vmul.f32 %v1441, %v1441
      %v1522 = vmul.f32 %v1444, %v1444
      %v1523 = vmul.f32 %v1449, %v1449
      %v1524 = vmul.f32 %v1452, %v1452
      %v1525 = vadd.f32 %v1493, %v1494
      %v1526 = vadd.f32 %v1525, %v1495
      %v1527 = vadd.f32 %v1526, %v1496
      %v1528 = vadd.f32 %v1527, %v1497
      %v1529 = vadd.f32 %v1528, %v1498
      %v1530 = vadd.f32 %v1529, %v1499
      %v1531 = vadd.f32 %v1530, %v1500
      %v1532 = vadd.f32 %v1531, %v1501
      %v1533 = vadd.f32 %v1532, %v1502
      %v1534 = vadd.f32 %v1533, %v1503
      %v1535 = vadd.f32 %v1534, %v1504
      %v1536 = vadd.f32 %v1535, %v1505
      %v1537 = vadd.f32 %v1536, %v1506
      %v1538 = vadd.f32 %v1537, %v1507
      %v1539 = vadd.f32 %v1538, %v1508
      %v1540 = vadd.f32 %v1539, %v1509
      %v1541 = vadd.f32 %v1540, %v1510
      %v1542 = vadd.f32 %v1541, %v1511
      %v1543 = vadd.f32 %v1542, %v1512
      %v1544 = vadd.f32 %v1543, %v1513
      %v1545 = vadd.f32 %v1544, %v1514
      %v1546 = vadd.f32 %v1545, %v1515
      %v1547 = vadd.f32 %v1546, %v1516
      %v1548 = vadd.f32 %v1547, %v1517
      %v1549 = vadd.f32 %v1548, %v1518
      %v1550 = vadd.f32 %v1549, %v1519
      %v1551 = vadd.f32 %v1550, %v1520
      %v1552 = vadd.f32 %v1551, %v1521
      %v1553 = vadd.f32 %v1552, %v1522
      %v1554 = vadd.f32 %v1553, %v1523
      %v1555 = vadd.f32 %v1554, %v1524
      %v1556 = vrot.slane %v1555, 4
      %v1557 = vadd.f32 %v1555, %v1556
      %v1558 = vrot.slane %v1557, 2
      %v1559 = vadd.f32 %v1557, %v1558
      %v1560 = vrot.slane %v1559, 1
      %v1561 = vadd.f32 %v1559, %v1560
      %1562 = vst [vmem:[%s203] sm:$0x1] %v1561
      %s1563 = sadd.s32 %s19, %s20
      %p1564 = scmp.lt.s32.totalorder %s1563, 1
      %s1565 = scalar_select %p1564, %s1563, 1
      %s1566 = scalar_lea.vmem %s2, %s1565
      %s1567 = sadd.s32 %s19, %s20
      %p1568 = scmp.lt.s32.totalorder %s1567, 1
      %s1569 = scalar_select %p1568, %s1567, 1
      %s1570 = scalar_lea.vmem %s3, %s1569
      // Predicated region
      $region29: #{conv_bn_relu.2} parent=27 // pred_check
        %p1571 = pneg %p96
      $region30: #{conv_bn_relu.2} parent=27 // pred_check_branch
        %1573 = sbr.rel (%p1571) target = $region32
      $region31: #{conv_bn_relu.2} parent=27 // pred_region
        %s1574 = sadd.s32 %s19, %s20
      $region32: #{conv_bn_relu.2} parent=27 // pred_fallthru
        _
      // Predicated region
      $region33: #{conv_bn_relu.2} parent=27 // pred_check
        %p1575 = pneg %p124
      $region34: #{conv_bn_relu.2} parent=27 // pred_check_branch
        %1577 = sbr.rel (%p1575) target = $region36
      $region35: #{conv_bn_relu.2} parent=27 // pred_region
        %s1578 = sadd.s32 %s19, %s20
      $region36: #{conv_bn_relu.2} parent=27 // pred_fallthru
        _
    $region28: #{conv_bn_relu.2} parent=5 // pred_fallthru
      _
    %p1579 = scmp.le.s32.totalorder 2, %s10
    // Predicated region
    $region37: #{conv_bn_relu.2} parent=5 // pred_check
      %p1580 = pneg %p1579
    $region38: #{conv_bn_relu.2} parent=5 // pred_check_branch
      %1582 = sbr.rel (%p1580) target = $region40
    $region39: #{conv_bn_relu.2} parent=5 // pred_region
      %s1583 = ssub.s32 %s10, 2
      // Predicated region
      $region41: #{conv_bn_relu.2} parent=39 // pred_check
        %p1584 = pneg %p102
      $region42: #{conv_bn_relu.2} parent=39 // pred_check_branch
        %1586 = sbr.rel (%p1584) target = $region44
      $region43: #{conv_bn_relu.2} parent=39 // pred_region
        %s1587 = sadd.s32 %s21, %s22
        %p1588 = scmp.lt.s32.totalorder %s1587, 1
        %s1589 = scalar_select %p1588, %s1587, 1
        %s1590 = scalar_lea.vmem %s2, %s1589
      $region44: #{conv_bn_relu.2} parent=39 // pred_fallthru
        _
      // Predicated region
      $region45: #{conv_bn_relu.2} parent=39 // pred_check
        %p1591 = pneg %p130
      $region46: #{conv_bn_relu.2} parent=39 // pred_check_branch
        %1593 = sbr.rel (%p1591) target = $region48
      $region47: #{conv_bn_relu.2} parent=39 // pred_region
        %s1594 = sadd.s32 %s21, %s22
        %p1595 = scmp.lt.s32.totalorder %s1594, 1
        %s1596 = scalar_select %p1595, %s1594, 1
        %s1597 = scalar_lea.vmem %s3, %s1596
      $region48: #{conv_bn_relu.2} parent=39 // pred_fallthru
        _
    $region40: #{conv_bn_relu.2} parent=5 // pred_fallthru
      _
  $region6: #{conv_bn_relu.2} parent=0 // loop_footer
    %s14 = sadd.s32 1, %s10
  $region7: #{conv_bn_relu.2} parent=0 // loop_footer_branch
    %9 = sbr.rel target = $region3
  $region8: #{conv_bn_relu.2} parent=0 // loop_exit
    _

// kernel: conv_bn_relu.3
$region0: #{conv_bn_relu.3}
  #allocation0 [shape = 'u32[]', space=smem, size = 0x4, offset = 0x4, fixed_abs, tag = 'smem constant byte address 0x4 - core index']
  #allocation1 [shape = 'u32[144,128]{1,0:T(1,128)}', space=vmem, size = 0x12000, scoped, tag = 'internal scratch']
  %s0 = inlined_call_operand.vmem [shape: bf16[2,18,18,4], index: 0, kind: input, shape index: {}]
  %s1 = inlined_call_operand.vmem [shape: bf16[128,128], index: 1, kind: input, shape index: {}]
  %s2 = inlined_call_operand.vmem [shape: f32[1,128], index: 2, kind: input, shape index: {}]
  %s3 = inlined_call_operand.vmem [shape: f32[1,128], index: 3, kind: input, shape index: {}]
  %s4 = inlined_call_operand.vmem [shape: f32[512,8], index: 4, kind: output, shape index: {}]
  %s5 = sld [smem:[#allocation0]]
  $region49: #{conv_bn_relu.3} parent=0
    _
  %s7 = ssub.s32 1, %s5
  %s8 = scalar_select 0, %s7, %s5
  loop: start=0, step=1, limit=4
  $region2: #{conv_bn_relu.3} parent=0 // loop_pre_header
    _
  $region3: #{conv_bn_relu.3} parent=0 // loop_header
    %s10 = sphi 0, %s14
    %p11 = scmp.ge.s32.totalorder %s10, 4
    %s17 = sphi 0, %s29
    %s18 = sphi 0, %s25
    %s19 = sphi 0, %s17
    %s20 = sphi 0, %s18
    %s21 = sphi 0, %s19
    %s22 = sphi 0, %s20
    %s34 = sphi 0, %s36
    %s37 = sphi 0, %s34
    %s38 = sphi 0, %s37
    %s54 = sphi 0, %s38
    %s58 = sphi 0, %s58
    %s60 = sphi 0, %s58
    %s61 = sphi 0, %s60
    %s75 = sphi 0, %s61
    %s79 = sphi 0, %s79
    %s81 = sphi 0, %s79
    %s82 = sphi 0, %s81
    %s96 = sphi 0, %s82
    %s100 = sphi 0, %s100
    %s102 = sphi 0, %s100
    %s103 = sphi 0, %s102
    %s117 = sphi 0, %s103
    %s125 = sphi 0, %s127
    %s128 = sphi 0, %s125
    %s129 = sphi 0, %s128
    %s145 = sphi 0, %s129
  $region4: #{conv_bn_relu.3} parent=0 // loop_header_branch
    %13 = sbr.rel (%p11) target = $region8
  $region5: #{conv_bn_relu.3} parent=0 // loop_body
    %s15 = ssub.s32 %s10, 1
    %s16 = ssub.s32 %s10, 2
    %s23 = sadd.s32 1, %s18
    %p24 = scmp.ge.s32.totalorder %s23, 1
    %s25 = scalar_select %p24, 0, %s23
    %s26 = sadd.s32 1, %s17
    %s27 = scalar_select %p24, %s26, %s17
    %p28 = scmp.ge.s32.totalorder %s27, 2
    %s29 = scalar_select %p28, 0, %s27
    %s30 = sadd.s32 %s17, %s18
    %s31 = sadd.s32 %s29, %s25
    %s32 = ssub.s32 %s30, %s31
    %p33 = scmp.eq.s32.totalorder %s32, 0
    %s35 = sadd.s32 %s34, 1
    %s36 = scalar_select %p33, %s34, %s35
    %p39 = pneg %p33
    %p40 = scmp.eq.s32.totalorder %s10, 1
    %p41 = por %p39, %p40
    %p42 = scmp.ne.s32.totalorder %s34, %s37
    %p43 = scmp.eq.s32.totalorder %s10, 0
    %p44 = por %p42, %p43
    %p45 = scmp.ne.s32.totalorder %s34, %s37
    %p46 = scmp.eq.s32.totalorder %s15, 1
    %p47 = por %p45, %p46
    %p48 = scmp.ne.s32.totalorder %s37, %s38
    %p49 = scmp.eq.s32.totalorder %s15, 0
    %p50 = por %p48, %p49
    %p51 = scmp.ne.s32.totalorder %s37, %s38
    %p52 = scmp.eq.s32.totalorder %s16, 1
    %p53 = por %p51, %p52
    %p55 = scmp.ne.s32.totalorder %s38, %s54
    %p56 = scmp.eq.s32.totalorder %s16, 0
    %p57 = por %p55, %p56
    %s59 = sadd.s32 %s58, 1
    %p62 = scmp.eq.s32.totalorder %s10, 1
    %p63 = scmp.ne.s32.totalorder %s58, %s60
    %p64 = scmp.eq.s32.totalorder %s10, 0
    %p65 = por %p63, %p64
    %p66 = scmp.ne.s32.totalorder %s58, %s60
    %p67 = scmp.eq.s32.totalorder %s15, 1
    %p68 = por %p66, %p67
    %p69 = scmp.ne.s32.totalorder %s60, %s61
    %p70 = scmp.eq.s32.totalorder %s15, 0
    %p71 = por %p69, %p70
    %p72 = scmp.ne.s32.totalorder %s60, %s61
    %p73 = scmp.eq.s32.totalorder %s16, 1
    %p74 = por %p72, %p73
    %p76 = scmp.ne.s32.totalorder %s61, %s75
    %p77 = scmp.eq.s32.totalorder %s16, 0
    %p78 = por %p76, %p77
    %s80 = sadd.s32 %s79, 1
    %p83 = scmp.eq.s32.totalorder %s10, 1
    %p84 = scmp.ne.s32.totalorder %s79, %s81
    %p85 = scmp.eq.s32.totalorder %s10, 0
    %p86 = por %p84, %p85
    %p87 = scmp.ne.s32.totalorder %s79, %s81
    %p88 = scmp.eq.s32.totalorder %s15, 1
    %p89 = por %p87, %p88
    %p90 = scmp.ne.s32.totalorder %s81, %s82
    %p91 = scmp.eq.s32.totalorder %s15, 0
    %p92 = por %p90, %p91
    %p93 = scmp.ne.s32.totalorder %s81, %s82
    %p94 = scmp.eq.s32.totalorder %s16, 1
    %p95 = por %p93, %p94
    %p97 = scmp.ne.s32.totalorder %s82, %s96
    %p98 = scmp.eq.s32.totalorder %s16, 0
    %p99 = por %p97, %p98
    %s101 = sadd.s32 %s100, 1
    %p104 = scmp.eq.s32.totalorder %s10, 1
    %p105 = scmp.ne.s32.totalorder %s100, %s102
    %p106 = scmp.eq.s32.totalorder %s10, 0
    %p107 = por %p105, %p106
    %p108 = scmp.ne.s32.totalorder %s100, %s102
    %p109 = scmp.eq.s32.totalorder %s15, 1
    %p110 = por %p108, %p109
    %p111 = scmp.ne.s32.totalorder %s102, %s103
    %p112 = scmp.eq.s32.totalorder %s15, 0
    %p113 = por %p111, %p112
    %p114 = scmp.ne.s32.totalorder %s102, %s103
    %p115 = scmp.eq.s32.totalorder %s16, 1
    %p116 = por %p114, %p115
    %p118 = scmp.ne.s32.totalorder %s103, %s117
    %p119 = scmp.eq.s32.totalorder %s16, 0
    %p120 = por %p118, %p119
    %s121 = sadd.s32 %s17, %s18
    %s122 = sadd.s32 %s29, %s25
    %s123 = ssub.s32 %s121, %s122
    %p124 = scmp.eq.s32.totalorder %s123, 0
    %s126 = sadd.s32 %s125, 1
    %s127 = scalar_select %p124, %s125, %s126
    %p130 = pneg %p124
    %p131 = scmp.eq.s32.totalorder %s10, 1
    %p132 = por %p130, %p131
    %p133 = scmp.ne.s32.totalorder %s125, %s128
    %p134 = scmp.eq.s32.totalorder %s10, 0
    %p135 = por %p133, %p134
    %p136 = scmp.ne.s32.totalorder %s125, %s128
    %p137 = scmp.eq.s32.totalorder %s15, 1
    %p138 = por %p136, %p137
    %p139 = scmp.ne.s32.totalorder %s128, %s129
    %p140 = scmp.eq.s32.totalorder %s15, 0
    %p141 = por %p139, %p140
    %p142 = scmp.ne.s32.totalorder %s128, %s129
    %p143 = scmp.eq.s32.totalorder %s16, 1
    %p144 = por %p142, %p143
    %p146 = scmp.ne.s32.totalorder %s129, %s145
    %p147 = scmp.eq.s32.totalorder %s16, 0
    %p148 = por %p146, %p147
    %p149 = scmp.le.s32.totalorder 1, %s10
    %p150 = scmp.lt.s32.totalorder %s10, 3
    %p151 = pnand %p149, %p150
    %p152 = pneg %p151
    // Predicated region
    $region9: #{conv_bn_relu.3} parent=5 // pred_check
      _
    $region10: #{conv_bn_relu.3} parent=5 // pred_check_branch
      %154 = sbr.rel (%p151) target = $region12
    $region11: #{conv_bn_relu.3} parent=5 // pred_region
      %s155 = ssub.s32 %s10, 1
      // Predicated region
      $region13: #{conv_bn_relu.3} parent=11 // pred_check
        %p156 = pneg %p71
      $region14: #{conv_bn_relu.3} parent=11 // pred_check_branch
        %158 = sbr.rel (%p156) target = $region16
      $region15: #{conv_bn_relu.3} parent=11 // pred_region
        _
      $region16: #{conv_bn_relu.3} parent=11 // pred_fallthru
        _
      // Predicated region
      $region17: #{conv_bn_relu.3} parent=11 // pred_check
        %p159 = pneg %p92
      $region18: #{conv_bn_relu.3} parent=11 // pred_check_branch
        %161 = sbr.rel (%p159) target = $region20
      $region19: #{conv_bn_relu.3} parent=11 // pred_region
        _
      $region20: #{conv_bn_relu.3} parent=11 // pred_fallthru
        _
      // Predicated region
      $region21: #{conv_bn_relu.3} parent=11 // pred_check
        %p162 = pneg %p113
      $region22: #{conv_bn_relu.3} parent=11 // pred_check_branch
        %164 = sbr.rel (%p162) target = $region24
      $region23: #{conv_bn_relu.3} parent=11 // pred_region
        _
      $region24: #{conv_bn_relu.3} parent=11 // pred_fallthru
        _
    $region12: #{conv_bn_relu.3} parent=5 // pred_fallthru
      _
    %p165 = scmp.lt.s32.totalorder %s10, 2
    // Predicated region
    $region25: #{conv_bn_relu.3} parent=5 // pred_check
      %p166 = pneg %p165
    $region26: #{conv_bn_relu.3} parent=5 // pred_check_branch
      %168 = sbr.rel (%p166) target = $region28
    $region27: #{conv_bn_relu.3} parent=5 // pred_region
      // Predicated region
      $region29: #{conv_bn_relu.3} parent=27 // pred_check
        %p169 = pneg %p44
      $region30: #{conv_bn_relu.3} parent=27 // pred_check_branch
        %171 = sbr.rel (%p169) target = $region32
      $region31: #{conv_bn_relu.3} parent=27 // pred_region
        %s172 = sadd.s32 %s17, %s18
        %p173 = scmp.lt.s32.totalorder %s172, 1
        %s174 = scalar_select %p173, %s172, 1
        %s175 = smul.addr %s174, 54
        %s176 = smul.addr %s175, 4
        %s177 = scalar_lea.vmem %s0, %s176
        %s178 = sadd.s32 %s17, %s18
      $region32: #{conv_bn_relu.3} parent=27 // pred_fallthru
        _
    $region28: #{conv_bn_relu.3} parent=5 // pred_fallthru
      _
    %p179 = scmp.le.s32.totalorder 1, %s10
    %p180 = scmp.lt.s32.totalorder %s10, 3
    %p181 = pnand %p179, %p180
    %p182 = pneg %p181
    // Predicated region
    $region33: #{conv_bn_relu.3} parent=5 // pred_check
      _
    $region34: #{conv_bn_relu.3} parent=5 // pred_check_branch
      %184 = sbr.rel (%p181) target = $region36
    $region35: #{conv_bn_relu.3} parent=5 // pred_region
      %s185 = ssub.s32 %s10, 1
      %s186 = sadd.s32 %s19, %s20
      %p187 = scmp.lt.s32.totalorder %s186, 1
      %s188 = scalar_select %p187, %s186, 1
      %s189 = smul.addr %s188, 54
      %s190 = smul.addr %s189, 4
      %s191 = scalar_lea.vmem %s0, %s190
      %p192 = pneg %p50
      %p193 = pneg %p47
      %p194 = pneg %p71
      %p195 = pneg %p68
      %p196 = pneg %p92
      %p197 = pneg %p89
      %p198 = pneg %p113
      %p199 = pneg %p110
      %p200 = pneg %p141
      %p201 = pneg %p138
      %s202 = sadd.s32 %s19, %s20
      %s203 = smul.u32 32, %s202
      %p204 = scmp.lt.s32.totalorder %s203, 63
      %s205 = scalar_select %p204, %s203, 63
      %s206 = smul.addr %s205, 8
      %s207 = scalar_lea.vmem %s4, %s206
      %s208 = sadd.s32 %s19, %s20
      %p209 = scmp.lt.s32.totalorder %s208, 1
      %s210 = scalar_select %p209, %s208, 1
      %s211 = smul.addr %s210, 54
      %s212 = smul.addr %s211, 4
      %s213 = scalar_lea.vmem %s0, %s212
      %s214 = sadd.s32 %s19, %s20
      %s215 = sadd.s32 %s19, %s20
      %s216 = smul.u32 32, %s215
      %p217 = scmp.lt.s32.totalorder %s216, 63
      %s218 = scalar_select %p217, %s216, 63
      %s219 = smul.addr %s218, 8
      %s220 = scalar_lea.vmem %s4, %s219
      %s221 = sadd.s32 %s19, %s20
      %s222 = smul.u32 32, %s221
      %v224 = vld [vmem:[%s213] sm:$0xf]
      %v225 = vld [vmem:[%s213 + $0x4] sm:$0xf]
      %v226 = vld [vmem:[%s213 + $0x8] sm:$0x1]
      %v227 = vld [vmem:[%s213 + $0xc] sm:$0xf]
      %v228 = vld [vmem:[%s213 + $0x10] sm:$0xf]
      %v229 = vld [vmem:[%s213 + $0x14] sm:$0x1]
      %v230 = vld [vmem:[%s213 + $0x18] sm:$0xf]
      %v231 = vld [vmem:[%s213 + $0x1c] sm:$0xf]
      %v232 = vld [vmem:[%s213 + $0x20] sm:$0x1]
      %v233 = vld [vmem:[%s213 + $0x24] sm:$0xf]
      %v234 = vld [vmem:[%s213 + $0x28] sm:$0xf]
      %v235 = vld [vmem:[%s213 + $0x2c] sm:$0x1]
      %v236 = vld [vmem:[%s213 + $0x30] sm:$0xf]
      %v237 = vld [vmem:[%s213 + $0x34] sm:$0xf]
      %v238 = vld [vmem:[%s213 + $0x38] sm:$0x1]
      %v239 = vld [vmem:[%s213 + $0x3c] sm:$0xf]
      %v240 = vld [vmem:[%s213 + $0x40] sm:$0xf]
      %v241 = vld [vmem:[%s213 + $0x44] sm:$0x1]
      %v242 = vld [vmem:[%s213 + $0x48] sm:$0xf]
      %v243 = vld [vmem:[%s213 + $0x4c] sm:$0xf]
      %v244 = vld [vmem:[%s213 + $0x50] sm:$0x1]
      %v245 = vld [vmem:[%s213 + $0x54] sm:$0xf]
      %v246 = vld [vmem:[%s213 + $0x58] sm:$0xf]
      %v247 = vld [vmem:[%s213 + $0x5c] sm:$0x1]
      %v248 = vld [vmem:[%s213 + $0x60] sm:$0xf]
      %v249 = vld [vmem:[%s213 + $0x64] sm:$0xf]
      %v250 = vld [vmem:[%s213 + $0x68] sm:$0x1]
      %v251 = vld [vmem:[%s213 + $0x6c] sm:$0xf]
      %v252 = vld [vmem:[%s213 + $0x70] sm:$0xf]
      %v253 = vld [vmem:[%s213 + $0x74] sm:$0x1]
      %v254 = vld [vmem:[%s213 + $0x78] sm:$0xf]
      %v255 = vld [vmem:[%s213 + $0x7c] sm:$0xf]
      %v256 = vld [vmem:[%s213 + $0x80] sm:$0x1]
      %v257 = vld [vmem:[%s213 + $0x84] sm:$0xf]
      %v258 = vld [vmem:[%s213 + $0x88] sm:$0xf]
      %v259 = vld [vmem:[%s213 + $0x8c] sm:$0x1]
      %v260 = vld [vmem:[%s213 + $0x90] sm:$0xf]
      %v261 = vld [vmem:[%s213 + $0x94] sm:$0xf]
      %v262 = vld [vmem:[%s213 + $0x98] sm:$0x1]
      %v263 = vld [vmem:[%s213 + $0x9c] sm:$0xf]
      %v264 = vld [vmem:[%s213 + $0xa0] sm:$0xf]
      %v265 = vld [vmem:[%s213 + $0xa4] sm:$0x1]
      %v266 = vld [vmem:[%s213 + $0xa8] sm:$0xf]
      %v267 = vld [vmem:[%s213 + $0xac] sm:$0xf]
      %v268 = vld [vmem:[%s213 + $0xb0] sm:$0x1]
      %v269 = vld [vmem:[%s213 + $0xb4] sm:$0xf]
      %v270 = vld [vmem:[%s213 + $0xb8] sm:$0xf]
      %v271 = vld [vmem:[%s213 + $0xbc] sm:$0x1]
      %v272 = vld [vmem:[%s213 + $0xc0] sm:$0xf]
      %v273 = vld [vmem:[%s213 + $0xc4] sm:$0xf]
      %v274 = vld [vmem:[%s213 + $0xc8] sm:$0x1]
      %v275 = vld [vmem:[%s213 + $0xcc] sm:$0xf]
      %v276 = vld [vmem:[%s213 + $0xd0] sm:$0xf]
      %v277 = vld [vmem:[%s213 + $0xd4] sm:$0x1]
      %v310 = vunpack.c.l.b16 %v224
      %v311 = vunpack.c.l.b16 %v225
      %v312 = vunpack.c.l.b16 %v227
      %v313 = vunpack.c.l.b16 %v228
      %v314 = vunpack.c.l.b16 %v230
      %v315 = vunpack.c.l.b16 %v231
      %v316 = vunpack.c.l.b16 %v233
      %v317 = vunpack.c.l.b16 %v234
      %v318 = vunpack.c.l.b16 %v236
      %v319 = vunpack.c.l.b16 %v237
      %v320 = vunpack.c.l.b16 %v239
      %v321 = vunpack.c.l.b16 %v240
      %v322 = vunpack.c.l.b16 %v242
      %v323 = vunpack.c.l.b16 %v243
      %v324 = vunpack.c.l.b16 %v245
      %v325 = vunpack.c.l.b16 %v246
      %v326 = vunpack.c.l.b16 %v248
      %v327 = vunpack.c.l.b16 %v249
      %v328 = vunpack.c.l.b16 %v251
      %v329 = vunpack.c.l.b16 %v252
      %v330 = vunpack.c.l.b16 %v254
      %v331 = vunpack.c.l.b16 %v255
      %v332 = vunpack.c.l.b16 %v257
      %v333 = vunpack.c.l.b16 %v258
      %v334 = vunpack.c.l.b16 %v260
      %v335 = vunpack.c.l.b16 %v261
      %v336 = vunpack.c.l.b16 %v263
      %v337 = vunpack.c.l.b16 %v264
      %v338 = vunpack.c.l.b16 %v266
      %v339 = vunpack.c.l.b16 %v267
      %v340 = vunpack.c.l.b16 %v269
      %v341 = vunpack.c.l.b16 %v270
      %v342 = vpack.c.b16 %v311, %v310
      %v343 = vpack.c.b16 %v313, %v312
      %v344 = vpack.c.b16 %v315, %v314
      %v345 = vpack.c.b16 %v317, %v316
      %v346 = vpack.c.b16 %v319, %v318
      %v347 = vpack.c.b16 %v321, %v320
      %v348 = vpack.c.b16 %v323, %v322
      %v349 = vpack.c.b16 %v325, %v324
      %v350 = vpack.c.b16 %v327, %v326
      %v351 = vpack.c.b16 %v329, %v328
      %v352 = vpack.c.b16 %v331, %v330
      %v353 = vpack.c.b16 %v333, %v332
      %v354 = vpack.c.b16 %v335, %v334
      %v355 = vpack.c.b16 %v337, %v336
      %v356 = vpack.c.b16 %v339, %v338
      %v357 = vpack.c.b16 %v341, %v340
      %v374 = vunpack.c.l.b16 %v226
      %v375 = vunpack.c.l.b16 %v229
      %v376 = vunpack.c.l.b16 %v232
      %v377 = vunpack.c.l.b16 %v235
      %v378 = vunpack.c.l.b16 %v238
      %v379 = vunpack.c.l.b16 %v241
      %v380 = vunpack.c.l.b16 %v244
      %v381 = vunpack.c.l.b16 %v247
      %v382 = vunpack.c.l.b16 %v250
      %v383 = vunpack.c.l.b16 %v253
      %v384 = vunpack.c.l.b16 %v256
      %v385 = vunpack.c.l.b16 %v259
      %v386 = vunpack.c.l.b16 %v262
      %v387 = vunpack.c.l.b16 %v265
      %v388 = vunpack.c.l.b16 %v268
      %v389 = vunpack.c.l.b16 %v271
      %v390 = vpack.c.b16 %v374, %v374
      %v391 = vpack.c.b16 %v375, %v375
      %v392 = vpack.c.b16 %v376, %v376
      %v393 = vpack.c.b16 %v377, %v377
      %v394 = vpack.c.b16 %v378, %v378
      %v395 = vpack.c.b16 %v379, %v379
      %v396 = vpack.c.b16 %v380, %v380
      %v397 = vpack.c.b16 %v381, %v381
      %v398 = vpack.c.b16 %v382, %v382
      %v399 = vpack.c.b16 %v383, %v383
      %v400 = vpack.c.b16 %v384, %v384
      %v401 = vpack.c.b16 %v385, %v385
      %v402 = vpack.c.b16 %v386, %v386
      %v403 = vpack.c.b16 %v387, %v387
      %v404 = vpack.c.b16 %v388, %v388
      %v405 = vpack.c.b16 %v389, %v389
      %vm406 = vsmask.f32 7424
      %v408 = vshrl.u32 %v342, 16
      %v410 = vshll.u32 %v342, 16
      %v412 = vrot.slane %v410, 1
      %v413 = vor.u32 %v408, %v412
      %v415 = vshll.u32 %v390, 16
      %v417 = vrot.slane %v415, 1
      %v418 = vsel %vm406, %v413, %v417
      %v420 = vshrl.u32 %v343, 16
      %v422 = vshll.u32 %v343, 16
      %v424 = vrot.slane %v422, 1
      %v425 = vor.u32 %v420, %v424
      %v427 = vshll.u32 %v391, 16
      %v429 = vrot.slane %v427, 1
      %v430 = vsel %vm406, %v425, %v429
      %v432 = vshrl.u32 %v344, 16
      %v434 = vshll.u32 %v344, 16
      %v436 = vrot.slane %v434, 1
      %v437 = vor.u32 %v432, %v436
      %v439 = vshll.u32 %v392, 16
      %v441 = vrot.slane %v439, 1
      %v442 = vsel %vm406, %v437, %v441
      %v444 = vshrl.u32 %v345, 16
      %v446 = vshll.u32 %v345, 16
      %v448 = vrot.slane %v446, 1
      %v449 = vor.u32 %v444, %v448
      %v451 = vshll.u32 %v393, 16
      %v453 = vrot.slane %v451, 1
      %v454 = vsel %vm406, %v449, %v453
      %v456 = vshrl.u32 %v346, 16
      %v458 = vshll.u32 %v346, 16
      %v460 = vrot.slane %v458, 1
      %v461 = vor.u32 %v456, %v460
      %v463 = vshll.u32 %v394, 16
      %v465 = vrot.slane %v463, 1
      %v466 = vsel %vm406, %v461, %v465
      %v468 = vshrl.u32 %v347, 16
      %v470 = vshll.u32 %v347, 16
      %v472 = vrot.slane %v470, 1
      %v473 = vor.u32 %v468, %v472
      %v475 = vshll.u32 %v395, 16
      %v477 = vrot.slane %v475, 1
      %v478 = vsel %vm406, %v473, %v477
      %v480 = vshrl.u32 %v348, 16
      %v482 = vshll.u32 %v348, 16
      %v484 = vrot.slane %v482, 1
      %v485 = vor.u32 %v480, %v484
      %v487 = vshll.u32 %v396, 16
      %v489 = vrot.slane %v487, 1
      %v490 = vsel %vm406, %v485, %v489
      %v492 = vshrl.u32 %v349, 16
      %v494 = vshll.u32 %v349, 16
      %v496 = vrot.slane %v494, 1
      %v497 = vor.u32 %v492, %v496
      %v499 = vshll.u32 %v397, 16
      %v501 = vrot.slane %v499, 1
      %v502 = vsel %vm406, %v497, %v501
      %v504 = vshrl.u32 %v350, 16
      %v506 = vshll.u32 %v350, 16
      %v508 = vrot.slane %v506, 1
      %v509 = vor.u32 %v504, %v508
      %v511 = vshll.u32 %v398, 16
      %v513 = vrot.slane %v511, 1
      %v514 = vsel %vm406, %v509, %v513
      %v516 = vshrl.u32 %v351, 16
      %v518 = vshll.u32 %v351, 16
      %v520 = vrot.slane %v518, 1
      %v521 = vor.u32 %v516, %v520
      %v523 = vshll.u32 %v399, 16
      %v525 = vrot.slane %v523, 1
      %v526 = vsel %vm406, %v521, %v525
      %v528 = vshrl.u32 %v352, 16
      %v530 = vshll.u32 %v352, 16
      %v532 = vrot.slane %v530, 1
      %v533 = vor.u32 %v528, %v532
      %v535 = vshll.u32 %v400, 16
      %v537 = vrot.slane %v535, 1
      %v538 = vsel %vm406, %v533, %v537
      %v540 = vshrl.u32 %v353, 16
      %v542 = vshll.u32 %v353, 16
      %v544 = vrot.slane %v542, 1
      %v545 = vor.u32 %v540, %v544
      %v547 = vshll.u32 %v401, 16
      %v549 = vrot.slane %v547, 1
      %v550 = vsel %vm406, %v545, %v549
      %v552 = vshrl.u32 %v354, 16
      %v554 = vshll.u32 %v354, 16
      %v556 = vrot.slane %v554, 1
      %v557 = vor.u32 %v552, %v556
      %v559 = vshll.u32 %v402, 16
      %v561 = vrot.slane %v559, 1
      %v562 = vsel %vm406, %v557, %v561
      %v564 = vshrl.u32 %v355, 16
      %v566 = vshll.u32 %v355, 16
      %v568 = vrot.slane %v566, 1
      %v569 = vor.u32 %v564, %v568
      %v571 = vshll.u32 %v403, 16
      %v573 = vrot.slane %v571, 1
      %v574 = vsel %vm406, %v569, %v573
      %v576 = vshrl.u32 %v356, 16
      %v578 = vshll.u32 %v356, 16
      %v580 = vrot.slane %v578, 1
      %v581 = vor.u32 %v576, %v580
      %v583 = vshll.u32 %v404, 16
      %v585 = vrot.slane %v583, 1
      %v586 = vsel %vm406, %v581, %v585
      %v588 = vshrl.u32 %v357, 16
      %v590 = vshll.u32 %v357, 16
      %v592 = vrot.slane %v590, 1
      %v593 = vor.u32 %v588, %v592
      %v595 = vshll.u32 %v405, 16
      %v597 = vrot.slane %v595, 1
      %v598 = vsel %vm406, %v593, %v597
      %599 = vrot.lane.b32.xlu0 %v418, 4
      %v600 = vpop.permute.xlu0 %599
      %601 = vrot.lane.b32.xlu0 %v430, 4
      %v602 = vpop.permute.xlu0 %601
      %603 = vrot.lane.b32.xlu0 %v442, 4
      %v604 = vpop.permute.xlu0 %603
      %605 = vrot.lane.b32.xlu0 %v454, 4
      %v606 = vpop.permute.xlu0 %605
      %607 = vrot.lane.b32.xlu0 %v466, 4
      %v608 = vpop.permute.xlu0 %607
      %609 = vrot.lane.b32.xlu0 %v478, 4
      %v610 = vpop.permute.xlu0 %609
      %611 = vrot.lane.b32.xlu0 %v490, 4
      %v612 = vpop.permute.xlu0 %611
      %613 = vrot.lane.b32.xlu0 %v502, 4
      %v614 = vpop.permute.xlu0 %613
      %615 = vrot.lane.b32.xlu0 %v514, 4
      %v616 = vpop.permute.xlu0 %615
      %617 = vrot.lane.b32.xlu0 %v526, 4
      %v618 = vpop.permute.xlu0 %617
      %619 = vrot.lane.b32.xlu0 %v538, 4
      %v620 = vpop.permute.xlu0 %619
      %621 = vrot.lane.b32.xlu0 %v550, 4
      %v622 = vpop.permute.xlu0 %621
      %623 = vrot.lane.b32.xlu0 %v562, 4
      %v624 = vpop.permute.xlu0 %623
      %625 = vrot.lane.b32.xlu0 %v574, 4
      %v626 = vpop.permute.xlu0 %625
      %627 = vrot.lane.b32.xlu0 %v586, 4
      %v628 = vpop.permute.xlu0 %627
      %629 = vrot.lane.b32.xlu0 %v598, 4
      %v630 = vpop.permute.xlu0 %629
      %vm631 = vcmask 1046528
      %v632 = vrot.slane %v342, 1
      %v633 = vrot.slane %v390, 1
      %v634 = vsel %vm631, %v632, %v633
      %v635 = vrot.slane %v343, 1
      %v636 = vrot.slane %v391, 1
      %v637 = vsel %vm631, %v635, %v636
      %v638 = vrot.slane %v344, 1
      %v639 = vrot.slane %v392, 1
      %v640 = vsel %vm631, %v638, %v639
      %v641 = vrot.slane %v345, 1
      %v642 = vrot.slane %v393, 1
      %v643 = vsel %vm631, %v641, %v642
      %v644 = vrot.slane %v346, 1
      %v645 = vrot.slane %v394, 1
      %v646 = vsel %vm631, %v644, %v645
      %v647 = vrot.slane %v347, 1
      %v648 = vrot.slane %v395, 1
      %v649 = vsel %vm631, %v647, %v648
      %v650 = vrot.slane %v348, 1
      %v651 = vrot.slane %v396, 1
      %v652 = vsel %vm631, %v650, %v651
      %v653 = vrot.slane %v349, 1
      %v654 = vrot.slane %v397, 1
      %v655 = vsel %vm631, %v653, %v654
      %v656 = vrot.slane %v350, 1
      %v657 = vrot.slane %v398, 1
      %v658 = vsel %vm631, %v656, %v657
      %v659 = vrot.slane %v351, 1
      %v660 = vrot.slane %v399, 1
      %v661 = vsel %vm631, %v659, %v660
      %v662 = vrot.slane %v352, 1
      %v663 = vrot.slane %v400, 1
      %v664 = vsel %vm631, %v662, %v663
      %v665 = vrot.slane %v353, 1
      %v666 = vrot.slane %v401, 1
      %v667 = vsel %vm631, %v665, %v666
      %v668 = vrot.slane %v354, 1
      %v669 = vrot.slane %v402, 1
      %v670 = vsel %vm631, %v668, %v669
      %v671 = vrot.slane %v355, 1
      %v672 = vrot.slane %v403, 1
      %v673 = vsel %vm631, %v671, %v672
      %v674 = vrot.slane %v356, 1
      %v675 = vrot.slane %v404, 1
      %v676 = vsel %vm631, %v674, %v675
      %v677 = vrot.slane %v357, 1
      %v678 = vrot.slane %v405, 1
      %v679 = vsel %vm631, %v677, %v678
      %680 = vrot.lane.b32.xlu0 %v634, 8
      %v681 = vpop.permute.xlu0 %680
      %682 = vrot.lane.b32.xlu0 %v637, 8
      %v683 = vpop.permute.xlu0 %682
      %684 = vrot.lane.b32.xlu0 %v640, 8
      %v685 = vpop.permute.xlu0 %684
      %686 = vrot.lane.b32.xlu0 %v643, 8
      %v687 = vpop.permute.xlu0 %686
      %688 = vrot.lane.b32.xlu0 %v646, 8
      %v689 = vpop.permute.xlu0 %688
      %690 = vrot.lane.b32.xlu0 %v649, 8
      %v691 = vpop.permute.xlu0 %690
      %692 = vrot.lane.b32.xlu0 %v652, 8
      %v693 = vpop.permute.xlu0 %692
      %694 = vrot.lane.b32.xlu0 %v655, 8
      %v695 = vpop.permute.xlu0 %694
      %696 = vrot.lane.b32.xlu0 %v658, 8
      %v697 = vpop.permute.xlu0 %696
      %698 = vrot.lane.b32.xlu0 %v661, 8
      %v699 = vpop.permute.xlu0 %698
      %700 = vrot.lane.b32.xlu0 %v664, 8
      %v701 = vpop.permute.xlu0 %700
      %702 = vrot.lane.b32.xlu0 %v667, 8
      %v703 = vpop.permute.xlu0 %702
      %704 = vrot.lane.b32.xlu0 %v670, 8
      %v705 = vpop.permute.xlu0 %704
      %706 = vrot.lane.b32.xlu0 %v673, 8
      %v707 = vpop.permute.xlu0 %706
      %708 = vrot.lane.b32.xlu0 %v676, 8
      %v709 = vpop.permute.xlu0 %708
      %710 = vrot.lane.b32.xlu0 %v679, 8
      %v711 = vpop.permute.xlu0 %710
      %v714 = vunpack.c.l.b16 %v272
      %v715 = vunpack.c.l.b16 %v273
      %v716 = vpack.c.b16 %v715, %v714
      %717 = vrot.lane.b32.xlu0 %v343, 12
      %v718 = vpop.permute.xlu0 %717
      %719 = vrot.lane.b32.xlu0 %v344, 12
      %v720 = vpop.permute.xlu0 %719
      %721 = vrot.lane.b32.xlu0 %v345, 12
      %v722 = vpop.permute.xlu0 %721
      %723 = vrot.lane.b32.xlu0 %v346, 12
      %v724 = vpop.permute.xlu0 %723
      %725 = vrot.lane.b32.xlu0 %v347, 12
      %v726 = vpop.permute.xlu0 %725
      %727 = vrot.lane.b32.xlu0 %v348, 12
      %v728 = vpop.permute.xlu0 %727
      %729 = vrot.lane.b32.xlu0 %v349, 12
      %v730 = vpop.permute.xlu0 %729
      %731 = vrot.lane.b32.xlu0 %v350, 12
      %v732 = vpop.permute.xlu0 %731
      %733 = vrot.lane.b32.xlu0 %v351, 12
      %v734 = vpop.permute.xlu0 %733
      %735 = vrot.lane.b32.xlu0 %v352, 12
      %v736 = vpop.permute.xlu0 %735
      %737 = vrot.lane.b32.xlu0 %v353, 12
      %v738 = vpop.permute.xlu0 %737
      %739 = vrot.lane.b32.xlu0 %v354, 12
      %v740 = vpop.permute.xlu0 %739
      %741 = vrot.lane.b32.xlu0 %v355, 12
      %v742 = vpop.permute.xlu0 %741
      %743 = vrot.lane.b32.xlu0 %v356, 12
      %v744 = vpop.permute.xlu0 %743
      %745 = vrot.lane.b32.xlu0 %v357, 12
      %v746 = vpop.permute.xlu0 %745
      %747 = vrot.lane.b32.xlu0 %v716, 12
      %v748 = vpop.permute.xlu0 %747
      %v750 = vunpack.c.l.b16 %v274
      %v751 = vpack.c.b16 %v750, %v750
      %v753 = vshrl.u32 %v716, 16
      %v755 = vshll.u32 %v716, 16
      %v757 = vrot.slane %v755, 1
      %v758 = vor.u32 %v753, %v757
      %v760 = vshll.u32 %v751, 16
      %v762 = vrot.slane %v760, 1
      %v763 = vsel %vm406, %v758, %v762
      %764 = vrot.lane.b32.xlu0 %v430, 16
      %v765 = vpop.permute.xlu0 %764
      %766 = vrot.lane.b32.xlu0 %v442, 16
      %v767 = vpop.permute.xlu0 %766
      %768 = vrot.lane.b32.xlu0 %v454, 16
      %v769 = vpop.permute.xlu0 %768
      %770 = vrot.lane.b32.xlu0 %v466, 16
      %v771 = vpop.permute.xlu0 %770
      %772 = vrot.lane.b32.xlu0 %v478, 16
      %v773 = vpop.permute.xlu0 %772
      %774 = vrot.lane.b32.xlu0 %v490, 16
      %v775 = vpop.permute.xlu0 %774
      %776 = vrot.lane.b32.xlu0 %v502, 16
      %v777 = vpop.permute.xlu0 %776
      %778 = vrot.lane.b32.xlu0 %v514, 16
      %v779 = vpop.permute.xlu0 %778
      %780 = vrot.lane.b32.xlu0 %v526, 16
      %v781 = vpop.permute.xlu0 %780
      %782 = vrot.lane.b32.xlu0 %v538, 16
      %v783 = vpop.permute.xlu0 %782
      %784 = vrot.lane.b32.xlu0 %v550, 16
      %v785 = vpop.permute.xlu0 %784
      %786 = vrot.lane.b32.xlu0 %v562, 16
      %v787 = vpop.permute.xlu0 %786
      %788 = vrot.lane.b32.xlu0 %v574, 16
      %v789 = vpop.permute.xlu0 %788
      %790 = vrot.lane.b32.xlu0 %v586, 16
      %v791 = vpop.permute.xlu0 %790
      %792 = vrot.lane.b32.xlu0 %v598, 16
      %v793 = vpop.permute.xlu0 %792
      %794 = vrot.lane.b32.xlu0 %v763, 16
      %v795 = vpop.permute.xlu0 %794
      %v796 = vrot.slane %v716, 1
      %v797 = vrot.slane %v751, 1
      %v798 = vsel %vm631, %v796, %v797
      %799 = vrot.lane.b32.xlu0 %v637, 20
      %v800 = vpop.permute.xlu0 %799
      %801 = vrot.lane.b32.xlu0 %v640, 20
      %v802 = vpop.permute.xlu0 %801
      %803 = vrot.lane.b32.xlu0 %v643, 20
      %v804 = vpop.permute.xlu0 %803
      %805 = vrot.lane.b32.xlu0 %v646, 20
      %v806 = vpop.permute.xlu0 %805
      %807 = vrot.lane.b32.xlu0 %v649, 20
      %v808 = vpop.permute.xlu0 %807
      %809 = vrot.lane.b32.xlu0 %v652, 20
      %v810 = vpop.permute.xlu0 %809
      %811 = vrot.lane.b32.xlu0 %v655, 20
      %v812 = vpop.permute.xlu0 %811
      %813 = vrot.lane.b32.xlu0 %v658, 20
      %v814 = vpop.permute.xlu0 %813
      %815 = vrot.lane.b32.xlu0 %v661, 20
      %v816 = vpop.permute.xlu0 %815
      %817 = vrot.lane.b32.xlu0 %v664, 20
      %v818 = vpop.permute.xlu0 %817
      %819 = vrot.lane.b32.xlu0 %v667, 20
      %v820 = vpop.permute.xlu0 %819
      %821 = vrot.lane.b32.xlu0 %v670, 20
      %v822 = vpop.permute.xlu0 %821
      %823 = vrot.lane.b32.xlu0 %v673, 20
      %v824 = vpop.permute.xlu0 %823
      %825 = vrot.lane.b32.xlu0 %v676, 20
      %v826 = vpop.permute.xlu0 %825
      %827 = vrot.lane.b32.xlu0 %v679, 20
      %v828 = vpop.permute.xlu0 %827
      %829 = vrot.lane.b32.xlu0 %v798, 20
      %v830 = vpop.permute.xlu0 %829
      %v833 = vunpack.c.l.b16 %v275
      %v834 = vunpack.c.l.b16 %v276
      %v835 = vpack.c.b16 %v834, %v833
      %836 = vrot.lane.b32.xlu0 %v344, 24
      %v837 = vpop.permute.xlu0 %836
      %838 = vrot.lane.b32.xlu0 %v345, 24
      %v839 = vpop.permute.xlu0 %838
      %840 = vrot.lane.b32.xlu0 %v346, 24
      %v841 = vpop.permute.xlu0 %840
      %842 = vrot.lane.b32.xlu0 %v347, 24
      %v843 = vpop.permute.xlu0 %842
      %844 = vrot.lane.b32.xlu0 %v348, 24
      %v845 = vpop.permute.xlu0 %844
      %846 = vrot.lane.b32.xlu0 %v349, 24
      %v847 = vpop.permute.xlu0 %846
      %848 = vrot.lane.b32.xlu0 %v350, 24
      %v849 = vpop.permute.xlu0 %848
      %850 = vrot.lane.b32.xlu0 %v351, 24
      %v851 = vpop.permute.xlu0 %850
      %852 = vrot.lane.b32.xlu0 %v352, 24
      %v853 = vpop.permute.xlu0 %852
      %854 = vrot.lane.b32.xlu0 %v353, 24
      %v855 = vpop.permute.xlu0 %854
      %856 = vrot.lane.b32.xlu0 %v354, 24
      %v857 = vpop.permute.xlu0 %856
      %858 = vrot.lane.b32.xlu0 %v355, 24
      %v859 = vpop.permute.xlu0 %858
      %860 = vrot.lane.b32.xlu0 %v356, 24
      %v861 = vpop.permute.xlu0 %860
      %862 = vrot.lane.b32.xlu0 %v357, 24
      %v863 = vpop.permute.xlu0 %862
      %864 = vrot.lane.b32.xlu0 %v716, 24
      %v865 = vpop.permute.xlu0 %864
      %866 = vrot.lane.b32.xlu0 %v835, 24
      %v867 = vpop.permute.xlu0 %866
      %v869 = vunpack.c.l.b16 %v277
      %v870 = vpack.c.b16 %v869, %v869
      %v872 = vshrl.u32 %v835, 16
      %v874 = vshll.u32 %v835, 16
      %v876 = vrot.slane %v874, 1
      %v877 = vor.u32 %v872, %v876
      %v879 = vshll.u32 %v870, 16
      %v881 = vrot.slane %v879, 1
      %v882 = vsel %vm406, %v877, %v881
      %883 = vrot.lane.b32.xlu0 %v442, 28
      %v884 = vpop.permute.xlu0 %883
      %885 = vrot.lane.b32.xlu0 %v454, 28
      %v886 = vpop.permute.xlu0 %885
      %887 = vrot.lane.b32.xlu0 %v466, 28
      %v888 = vpop.permute.xlu0 %887
      %889 = vrot.lane.b32.xlu0 %v478, 28
      %v890 = vpop.permute.xlu0 %889
      %891 = vrot.lane.b32.xlu0 %v490, 28
      %v892 = vpop.permute.xlu0 %891
      %893 = vrot.lane.b32.xlu0 %v502, 28
      %v894 = vpop.permute.xlu0 %893
      %895 = vrot.lane.b32.xlu0 %v514, 28
      %v896 = vpop.permute.xlu0 %895
      %897 = vrot.lane.b32.xlu0 %v526, 28
      %v898 = vpop.permute.xlu0 %897
      %899 = vrot.lane.b32.xlu0 %v538, 28
      %v900 = vpop.permute.xlu0 %899
      %901 = vrot.lane.b32.xlu0 %v550, 28
      %v902 = vpop.permute.xlu0 %901
      %903 = vrot.lane.b32.xlu0 %v562, 28
      %v904 = vpop.permute.xlu0 %903
      %905 = vrot.lane.b32.xlu0 %v574, 28
      %v906 = vpop.permute.xlu0 %905
      %907 = vrot.lane.b32.xlu0 %v586, 28
      %v908 = vpop.permute.xlu0 %907
      %909 = vrot.lane.b32.xlu0 %v598, 28
      %v910 = vpop.permute.xlu0 %909
      %911 = vrot.lane.b32.xlu0 %v763, 28
      %v912 = vpop.permute.xlu0 %911
      %913 = vrot.lane.b32.xlu0 %v882, 28
      %v914 = vpop.permute.xlu0 %913
      %v915 = vrot.slane %v835, 1
      %v916 = vrot.slane %v870, 1
      %v917 = vsel %vm631, %v915, %v916
      %918 = vrot.lane.b32.xlu0 %v640, 32
      %v919 = vpop.permute.xlu0 %918
      %920 = vrot.lane.b32.xlu0 %v643, 32
      %v921 = vpop.permute.xlu0 %920
      %922 = vrot.lane.b32.xlu0 %v646, 32
      %v923 = vpop.permute.xlu0 %922
      %924 = vrot.lane.b32.xlu0 %v649, 32
      %v925 = vpop.permute.xlu0 %924
      %926 = vrot.lane.b32.xlu0 %v652, 32
      %v927 = vpop.permute.xlu0 %926
      %928 = vrot.lane.b32.xlu0 %v655, 32
      %v929 = vpop.permute.xlu0 %928
      %930 = vrot.lane.b32.xlu0 %v658, 32
      %v931 = vpop.permute.xlu0 %930
      %932 = vrot.lane.b32.xlu0 %v661, 32
      %v933 = vpop.permute.xlu0 %932
      %934 = vrot.lane.b32.xlu0 %v664, 32
      %v935 = vpop.permute.xlu0 %934
      %936 = vrot.lane.b32.xlu0 %v667, 32
      %v937 = vpop.permute.xlu0 %936
      %938 = vrot.lane.b32.xlu0 %v670, 32
      %v939 = vpop.permute.xlu0 %938
      %940 = vrot.lane.b32.xlu0 %v673, 32
      %v941 = vpop.permute.xlu0 %940
      %942 = vrot.lane.b32.xlu0 %v676, 32
      %v943 = vpop.permute.xlu0 %942
      %944 = vrot.lane.b32.xlu0 %v679, 32
      %v945 = vpop.permute.xlu0 %944
      %946 = vrot.lane.b32.xlu0 %v798, 32
      %v947 = vpop.permute.xlu0 %946
      %948 = vrot.lane.b32.xlu0 %v917, 32
      %v949 = vpop.permute.xlu0 %948
      %vm950 = vcmask 31744
      %v952 = vsel %vm950, %v342, %v600
      %v954 = vsel %vm950, %v343, %v602
      %v956 = vsel %vm950, %v344, %v604
      %v958 = vsel %vm950, %v345, %v606
      %v960 = vsel %vm950, %v346, %v608
      %v962 = vsel %vm950, %v347, %v610
      %v964 = vsel %vm950, %v348, %v612
      %v966 = vsel %vm950, %v349, %v614
      %v968 = vsel %vm950, %v350, %v616
      %v970 = vsel %vm950, %v351, %v618
      %v972 = vsel %vm950, %v352, %v620
      %v974 = vsel %vm950, %v353, %v622
      %v976 = vsel %vm950, %v354, %v624
      %v978 = vsel %vm950, %v355, %v626
      %v980 = vsel %vm950, %v356, %v628
      %v982 = vsel %vm950, %v357, %v630
      %vm983 = vcmask 64512
      %v985 = vsel %vm983, %v952, %v681
      %v987 = vsel %vm983, %v954, %v683
      %v989 = vsel %vm983, %v956, %v685
      %v991 = vsel %vm983, %v958, %v687
      %v993 = vsel %vm983, %v960, %v689
      %v995 = vsel %vm983, %v962, %v691
      %v997 = vsel %vm983, %v964, %v693
      %v999 = vsel %vm983, %v966, %v695
      %v1001 = vsel %vm983, %v968, %v697
      %v1003 = vsel %vm983, %v970, %v699
      %v1005 = vsel %vm983, %v972, %v701
      %v1007 = vsel %vm983, %v974, %v703
      %v1009 = vsel %vm983, %v976, %v705
      %v1011 = vsel %vm983, %v978, %v707
      %v1013 = vsel %vm983, %v980, %v709
      %v1015 = vsel %vm983, %v982, %v711
      %vm1016 = vcmask 97280
      %v1018 = vsel %vm1016, %v985, %v718
      %v1020 = vsel %vm1016, %v987, %v720
      %v1022 = vsel %vm1016, %v989, %v722
      %v1024 = vsel %vm1016, %v991, %v724
      %v1026 = vsel %vm1016, %v993, %v726
      %v1028 = vsel %vm1016, %v995, %v728
      %v1030 = vsel %vm1016, %v997, %v730
      %v1032 = vsel %vm1016, %v999, %v732
      %v1034 = vsel %vm1016, %v1001, %v734
      %v1036 = vsel %vm1016, %v1003, %v736
      %v1038 = vsel %vm1016, %v1005, %v738
      %v1040 = vsel %vm1016, %v1007, %v740
      %v1042 = vsel %vm1016, %v1009, %v742
      %v1044 = vsel %vm1016, %v1011, %v744
      %v1046 = vsel %vm1016, %v1013, %v746
      %v1048 = vsel %vm1016, %v1015, %v748
      %vm1049 = vcmask 130048
      %v1051 = vsel %vm1049, %v1018, %v765
      %v1053 = vsel %vm1049, %v1020, %v767
      %v1055 = vsel %vm1049, %v1022, %v769
      %v1057 = vsel %vm1049, %v1024, %v771
      %v1059 = vsel %vm1049, %v1026, %v773
      %v1061 = vsel %vm1049, %v1028, %v775
      %v1063 = vsel %vm1049, %v1030, %v777
      %v1065 = vsel %vm1049, %v1032, %v779
      %v1067 = vsel %vm1049, %v1034, %v781
      %v1069 = vsel %vm1049, %v1036, %v783
      %v1071 = vsel %vm1049, %v1038, %v785
      %v1073 = vsel %vm1049, %v1040, %v787
      %v1075 = vsel %vm1049, %v1042, %v789
      %v1077 = vsel %vm1049, %v1044, %v791
      %v1079 = vsel %vm1049, %v1046, %v793
      %v1081 = vsel %vm1049, %v1048, %v795
      %vm1082 = vcmask 162816
      %v1084 = vsel %vm1082, %v1051, %v800
      %v1086 = vsel %vm1082, %v1053, %v802
      %v1088 = vsel %vm1082, %v1055, %v804
      %v1090 = vsel %vm1082, %v1057, %v806
      %v1092 = vsel %vm1082, %v1059, %v808
      %v1094 = vsel %vm1082, %v1061, %v810
      %v1096 = vsel %vm1082, %v1063, %v812
      %v1098 = vsel %vm1082, %v1065, %v814
      %v1100 = vsel %vm1082, %v1067, %v816
      %v1102 = vsel %vm1082, %v1069, %v818
      %v1104 = vsel %vm1082, %v1071, %v820
      %v1106 = vsel %vm1082, %v1073, %v822
      %v1108 = vsel %vm1082, %v1075, %v824
      %v1110 = vsel %vm1082, %v1077, %v826
      %v1112 = vsel %vm1082, %v1079, %v828
      %v1114 = vsel %vm1082, %v1081, %v830
      %vm1115 = vcmask 195584
      %v1117 = vsel %vm1115, %v1084, %v837
      %v1119 = vsel %vm1115, %v1086, %v839
      %v1121 = vsel %vm1115, %v1088, %v841
      %v1123 = vsel %vm1115, %v1090, %v843
      %v1125 = vsel %vm1115, %v1092, %v845
      %v1127 = vsel %vm1115, %v1094, %v847
      %v1129 = vsel %vm1115, %v1096, %v849
      %v1131 = vsel %vm1115, %v1098, %v851
      %v1133 = vsel %vm1115, %v1100, %v853
      %v1135 = vsel %vm1115, %v1102, %v855
      %v1137 = vsel %vm1115, %v1104, %v857
      %v1139 = vsel %vm1115, %v1106, %v859
      %v1141 = vsel %vm1115, %v1108, %v861
      %v1143 = vsel %vm1115, %v1110, %v863
      %v1145 = vsel %vm1115, %v1112, %v865
      %v1147 = vsel %vm1115, %v1114, %v867
      %vm1148 = vcmask 228352
      %v1150 = vsel %vm1148, %v1117, %v884
      %v1152 = vsel %vm1148, %v1119, %v886
      %v1154 = vsel %vm1148, %v1121, %v888
      %v1156 = vsel %vm1148, %v1123, %v890
      %v1158 = vsel %vm1148, %v1125, %v892
      %v1160 = vsel %vm1148, %v1127, %v894
      %v1162 = vsel %vm1148, %v1129, %v896
      %v1164 = vsel %vm1148, %v1131, %v898
      %v1166 = vsel %vm1148, %v1133, %v900
      %v1168 = vsel %vm1148, %v1135, %v902
      %v1170 = vsel %vm1148, %v1137, %v904
      %v1172 = vsel %vm1148, %v1139, %v906
      %v1174 = vsel %vm1148, %v1141, %v908
      %v1176 = vsel %vm1148, %v1143, %v910
      %v1178 = vsel %vm1148, %v1145, %v912
      %v1180 = vsel %vm1148, %v1147, %v914
      %vm1181 = vcmask 261120
      %v1183 = vsel %vm1181, %v1150, %v919
      %v1185 = vsel %vm1181, %v1152, %v921
      %v1187 = vsel %vm1181, %v1154, %v923
      %v1189 = vsel %vm1181, %v1156, %v925
      %v1191 = vsel %vm1181, %v1158, %v927
      %v1193 = vsel %vm1181, %v1160, %v929
      %v1195 = vsel %vm1181, %v1162, %v931
      %v1197 = vsel %vm1181, %v1164, %v933
      %v1199 = vsel %vm1181, %v1166, %v935
      %v1201 = vsel %vm1181, %v1168, %v937
      %v1203 = vsel %vm1181, %v1170, %v939
      %v1205 = vsel %vm1181, %v1172, %v941
      %v1207 = vsel %vm1181, %v1174, %v943
      %v1209 = vsel %vm1181, %v1176, %v945
      %v1211 = vsel %vm1181, %v1178, %v947
      %v1213 = vsel %vm1181, %v1180, %v949
      %vm1214 = vcmask 293888
      %v1216 = vsel %vm1214, %v1183, 0
      %v1218 = vsel %vm1214, %v1185, 0
      %v1220 = vsel %vm1214, %v1187, 0
      %v1222 = vsel %vm1214, %v1189, 0
      %v1224 = vsel %vm1214, %v1191, 0
      %v1226 = vsel %vm1214, %v1193, 0
      %v1228 = vsel %vm1214, %v1195, 0
      %v1230 = vsel %vm1214, %v1197, 0
      %v1232 = vsel %vm1214, %v1199, 0
      %v1234 = vsel %vm1214, %v1201, 0
      %v1236 = vsel %vm1214, %v1203, 0
      %v1238 = vsel %vm1214, %v1205, 0
      %v1240 = vsel %vm1214, %v1207, 0
      %v1242 = vsel %vm1214, %v1209, 0
      %v1244 = vsel %vm1214, %v1211, 0
      %v1246 = vsel %vm1214, %v1213, 0
      %v1248 = vld [vmem:[%s1] sm:$0xf]
      %v1249 = vld [vmem:[%s1 + $0x4] sm:$0xf]
      %v1250 = vld [vmem:[%s1 + $0x8] sm:$0xf]
      %v1251 = vld [vmem:[%s1 + $0xc] sm:$0xf]
      %v1252 = vld [vmem:[%s1 + $0x10] sm:$0xf]
      %v1253 = vld [vmem:[%s1 + $0x14] sm:$0xf]
      %v1254 = vld [vmem:[%s1 + $0x18] sm:$0xf]
      %v1255 = vld [vmem:[%s1 + $0x1c] sm:$0xf]
      %v1256 = vld [vmem:[%s1 + $0x20] sm:$0xf]
      %v1257 = vld [vmem:[%s1 + $0x24] sm:$0xf]
      %v1258 = vld [vmem:[%s1 + $0x28] sm:$0xf]
      %v1259 = vld [vmem:[%s1 + $0x2c] sm:$0xf]
      %v1260 = vld [vmem:[%s1 + $0x30] sm:$0xf]
      %v1261 = vld [vmem:[%s1 + $0x34] sm:$0xf]
      %v1262 = vld [vmem:[%s1 + $0x38] sm:$0xf]
      %v1263 = vld [vmem:[%s1 + $0x3c] sm:$0xf]
      %v1280 = vunpack.c.l.b16 %v1248
      %v1281 = vunpack.c.l.b16 %v1249
      %v1282 = vunpack.c.l.b16 %v1250
      %v1283 = vunpack.c.l.b16 %v1251
      %v1284 = vunpack.c.l.b16 %v1252
      %v1285 = vunpack.c.l.b16 %v1253
      %v1286 = vunpack.c.l.b16 %v1254
      %v1287 = vunpack.c.l.b16 %v1255
      %v1288 = vunpack.c.l.b16 %v1256
      %v1289 = vunpack.c.l.b16 %v1257
      %v1290 = vunpack.c.l.b16 %v1258
      %v1291 = vunpack.c.l.b16 %v1259
      %v1292 = vunpack.c.l.b16 %v1260
      %v1293 = vunpack.c.l.b16 %v1261
      %v1294 = vunpack.c.l.b16 %v1262
      %v1295 = vunpack.c.l.b16 %v1263
      %v1296 = vpack.c.b16 %v1281, %v1280
      %v1297 = vpack.c.b16 %v1283, %v1282
      %v1298 = vpack.c.b16 %v1285, %v1284
      %v1299 = vpack.c.b16 %v1287, %v1286
      %v1300 = vpack.c.b16 %v1289, %v1288
      %v1301 = vpack.c.b16 %v1291, %v1290
      %v1302 = vpack.c.b16 %v1293, %v1292
      %v1303 = vpack.c.b16 %v1295, %v1294
      %1312 = vmatprep.subr.bf16.mxu0 0
      %1313 = vmatpush1.bf16.msra.mxu0 %v1296
      %1314 = vmatprep.subr.bf16.mxu0 0
      %1315 = vmatpush1.bf16.msra.mxu0 %v1297
      %1316 = vmatprep.subr.bf16.mxu0 0
      %1317 = vmatpush1.bf16.msra.mxu0 %v1298
      %1318 = vmatprep.subr.bf16.mxu0 0
      %1319 = vmatpush1.bf16.msra.mxu0 %v1299
      %1320 = vmatprep.subr.bf16.mxu0 0
      %1321 = vmatpush1.bf16.msra.mxu0 %v1300
      %1322 = vmatprep.subr.bf16.mxu0 0
      %1323 = vmatpush1.bf16.msra.mxu0 %v1301
      %1324 = vmatprep.subr.bf16.mxu0 0
      %1325 = vmatpush1.bf16.msra.mxu0 %v1302
      %1326 = vmatprep.subr.bf16.mxu0 0
      %1327 = vmatpush1.bf16.msra.mxu0 %v1303
      %1328 = vmatprep.subr.bf16.mxu0 0
      %1329 = vmatpush1.bf16.msra.mxu0 0
      %1330 = vmatprep.subr.bf16.mxu0 0
      %1331 = vmatpush1.bf16.msra.mxu0 0
      %1332 = vmatprep.subr.bf16.mxu0 0
      %1333 = vmatpush1.bf16.msra.mxu0 0
      %1334 = vmatprep.subr.bf16.mxu0 0
      %1335 = vmatpush1.bf16.msra.mxu0 0
      %1336 = vmatprep.subr.bf16.mxu0 0
      %1337 = vmatpush1.bf16.msra.mxu0 0
      %1338 = vmatprep.subr.bf16.mxu0 0
      %1339 = vmatpush1.bf16.msra.mxu0 0
      %1340 = vmatprep.subr.bf16.mxu0 0
      %1341 = vmatpush1.bf16.msra.mxu0 0
      %1342 = vmatprep.subr.bf16.mxu0 0
      %1343 = vmatpush1.bf16.msra.mxu0 0
      %1344 = vmatprep.mubr.bf16.mxu0 0
      %1345 = vmatmul.mubr.bf16.gmra.mrb[0].mxu0 %v1216
      %v1346 = vpop.f32.mrb[0].mxu0
      %v1347 = vadd.f32 0.0, %v1346
      %v1348 = vpop.f32.mrb[0].mxu0
      %v1349 = vpop.f32.mrb[0].mxu0
      %v1350 = vadd.f32 0.0, %v1349
      %v1351 = vpop.f32.mrb[0].mxu0
      %1352 = vmatprep.mubr.bf16.mxu0 0
      %1353 = vmatmul.mubr.bf16.gmra.mrb[0].mxu0 %v1218
      %v1354 = vpop.f32.mrb[0].mxu0
      %v1355 = vadd.f32 0.0, %v1354
      %v1356 = vpop.f32.mrb[0].mxu0
      %v1357 = vpop.f32.mrb[0].mxu0
      %v1358 = vadd.f32 0.0, %v1357
      %v1359 = vpop.f32.mrb[0].mxu0
      %1360 = vmatprep.mubr.bf16.mxu0 0
      %1361 = vmatmul.mubr.bf16.gmra.mrb[0].mxu0 %v1220
      %v1362 = vpop.f32.mrb[0].mxu0
      %v1363 = vadd.f32 0.0, %v1362
      %v1364 = vpop.f32.mrb[0].mxu0
      %v1365 = vpop.f32.mrb[0].mxu0
      %v1366 = vadd.f32 0.0, %v1365
      %v1367 = vpop.f32.mrb[0].mxu0
      %1368 = vmatprep.mubr.bf16.mxu0 0
      %1369 = vmatmul.mubr.bf16.gmra.mrb[0].mxu0 %v1222
      %v1370 = vpop.f32.mrb[0].mxu0
      %v1371 = vadd.f32 0.0, %v1370
      %v1372 = vpop.f32.mrb[0].mxu0
      %v1373 = vpop.f32.mrb[0].mxu0
      %v1374 = vadd.f32 0.0, %v1373
      %v1375 = vpop.f32.mrb[0].mxu0
      %1376 = vmatprep.mubr.bf16.mxu0 0
      %1377 = vmatmul.mubr.bf16.gmra.mrb[0].mxu0 %v1224
      %v1378 = vpop.f32.mrb[0].mxu0
      %v1379 = vadd.f32 0.0, %v1378
      %v1380 = vpop.f32.mrb[0].mxu0
      %v1381 = vpop.f32.mrb[0].mxu0
      %v1382 = vadd.f32 0.0, %v1381
      %v1383 = vpop.f32.mrb[0].mxu0
      %1384 = vmatprep.mubr.bf16.mxu0 0
      %1385 = vmatmul.mubr.bf16.gmra.mrb[0].mxu0 %v1226
      %v1386 = vpop.f32.mrb[0].mxu0
      %v1387 = vadd.f32 0.0, %v1386
      %v1388 = vpop.f32.mrb[0].mxu0
      %v1389 = vpop.f32.mrb[0].mxu0
      %v1390 = vadd.f32 0.0, %v1389
      %v1391 = vpop.f32.mrb[0].mxu0
      %1392 = vmatprep.mubr.bf16.mxu0 0
      %1393 = vmatmul.mubr.bf16.gmra.mrb[0].mxu0 %v1228
      %v1394 = vpop.f32.mrb[0].mxu0
      %v1395 = vadd.f32 0.0, %v1394
      %v1396 = vpop.f32.mrb[0].mxu0
      %v1397 = vpop.f32.mrb[0].mxu0
      %v1398 = vadd.f32 0.0, %v1397
      %v1399 = vpop.f32.mrb[0].mxu0
      %1400 = vmatprep.mubr.bf16.mxu0 0
      %1401 = vmatmul.mubr.bf16.gmra.mrb[0].mxu0 %v1230
      %v1402 = vpop.f32.mrb[0].mxu0
      %v1403 = vadd.f32 0.0, %v1402
      %v1404 = vpop.f32.mrb[0].mxu0
      %v1405 = vpop.f32.mrb[0].mxu0
      %v1406 = vadd.f32 0.0, %v1405
      %v1407 = vpop.f32.mrb[0].mxu0
      %1408 = vmatprep.mubr.bf16.mxu0 0
      %1409 = vmatmul.mubr.bf16.gmra.mrb[0].mxu0 %v1232
      %v1410 = vpop.f32.mrb[0].mxu0
      %v1411 = vadd.f32 0.0, %v1410
      %v1412 = vpop.f32.mrb[0].mxu0
      %v1413 = vpop.f32.mrb[0].mxu0
      %v1414 = vadd.f32 0.0, %v1413
      %v1415 = vpop.f32.mrb[0].mxu0
      %1416 = vmatprep.mubr.bf16.mxu0 0
      %1417 = vmatmul.mubr.bf16.gmra.mrb[0].mxu0 %v1234
      %v1418 = vpop.f32.mrb[0].mxu0
      %v1419 = vadd.f32 0.0, %v1418
      %v1420 = vpop.f32.mrb[0].mxu0
      %v1421 = vpop.f32.mrb[0].mxu0
      %v1422 = vadd.f32 0.0, %v1421
      %v1423 = vpop.f32.mrb[0].mxu0
      %1424 = vmatprep.mubr.bf16.mxu0 0
      %1425 = vmatmul.mubr.bf16.gmra.mrb[0].mxu0 %v1236
      %v1426 = vpop.f32.mrb[0].mxu0
      %v1427 = vadd.f32 0.0, %v1426
      %v1428 = vpop.f32.mrb[0].mxu0
      %v1429 = vpop.f32.mrb[0].mxu0
      %v1430 = vadd.f32 0.0, %v1429
      %v1431 = vpop.f32.mrb[0].mxu0
      %1432 = vmatprep.mubr.bf16.mxu0 0
      %1433 = vmatmul.mubr.bf16.gmra.mrb[0].mxu0 %v1238
      %v1434 = vpop.f32.mrb[0].mxu0
      %v1435 = vadd.f32 0.0, %v1434
      %v1436 = vpop.f32.mrb[0].mxu0
      %v1437 = vpop.f32.mrb[0].mxu0
      %v1438 = vadd.f32 0.0, %v1437
      %v1439 = vpop.f32.mrb[0].mxu0
      %1440 = vmatprep.mubr.bf16.mxu0 0
      %1441 = vmatmul.mubr.bf16.gmra.mrb[0].mxu0 %v1240
      %v1442 = vpop.f32.mrb[0].mxu0
      %v1443 = vadd.f32 0.0, %v1442
      %v1444 = vpop.f32.mrb[0].mxu0
      %v1445 = vpop.f32.mrb[0].mxu0
      %v1446 = vadd.f32 0.0, %v1445
      %v1447 = vpop.f32.mrb[0].mxu0
      %1448 = vmatprep.mubr.bf16.mxu0 0
      %1449 = vmatmul.mubr.bf16.gmra.mrb[0].mxu0 %v1242
      %v1450 = vpop.f32.mrb[0].mxu0
      %v1451 = vadd.f32 0.0, %v1450
      %v1452 = vpop.f32.mrb[0].mxu0
      %v1453 = vpop.f32.mrb[0].mxu0
      %v1454 = vadd.f32 0.0, %v1453
      %v1455 = vpop.f32.mrb[0].mxu0
      %1456 = vmatprep.mubr.bf16.mxu0 0
      %1457 = vmatmul.mubr.bf16.gmra.mrb[0].mxu0 %v1244
      %v1458 = vpop.f32.mrb[0].mxu0
      %v1459 = vadd.f32 0.0, %v1458
      %v1460 = vpop.f32.mrb[0].mxu0
      %v1461 = vpop.f32.mrb[0].mxu0
      %v1462 = vadd.f32 0.0, %v1461
      %v1463 = vpop.f32.mrb[0].mxu0
      %1464 = vmatprep.mubr.bf16.mxu0 0
      %1465 = vmatmul.mubr.bf16.gmra.mrb[0].mxu0 %v1246
      %v1466 = vpop.f32.mrb[0].mxu0
      %v1467 = vadd.f32 0.0, %v1466
      %v1468 = vpop.f32.mrb[0].mxu0
      %v1469 = vpop.f32.mrb[0].mxu0
      %v1470 = vadd.f32 0.0, %v1469
      %v1471 = vpop.f32.mrb[0].mxu0
      %1472 = vdwg.mxu0
      %v1473 = vld [vmem:[%s2] sm:$0x1]
      %v1475 = vlaneseq
      %v1476 = vshrl.u32 %v1475, 7
      %v1477 = vsub.s32 0, %v1476
      %v1478 = vrot.slane %v1473, %v1477
      %v1480 = vmul.f32 %v1347, %v1478
      %v1481 = vmul.f32 %v1350, %v1478
      %v1482 = vmul.f32 %v1355, %v1478
      %v1483 = vmul.f32 %v1358, %v1478
      %v1484 = vmul.f32 %v1363, %v1478
      %v1485 = vmul.f32 %v1366, %v1478
      %v1486 = vmul.f32 %v1371, %v1478
      %v1487 = vmul.f32 %v1374, %v1478
      %v1488 = vmul.f32 %v1379, %v1478
      %v1489 = vmul.f32 %v1382, %v1478
      %v1490 = vmul.f32 %v1387, %v1478
      %v1491 = vmul.f32 %v1390, %v1478
      %v1492 = vmul.f32 %v1395, %v1478
      %v1493 = vmul.f32 %v1398, %v1478
      %v1494 = vmul.f32 %v1403, %v1478
      %v1495 = vmul.f32 %v1406, %v1478
      %v1496 = vmul.f32 %v1411, %v1478
      %v1497 = vmul.f32 %v1414, %v1478
      %v1498 = vmul.f32 %v1419, %v1478
      %v1499 = vmul.f32 %v1422, %v1478
      %v1500 = vmul.f32 %v1427, %v1478
      %v1501 = vmul.f32 %v1430, %v1478
      %v1502 = vmul.f32 %v1435, %v1478
      %v1503 = vmul.f32 %v1438, %v1478
      %v1504 = vmul.f32 %v1443, %v1478
      %v1505 = vmul.f32 %v1446, %v1478
      %v1506 = vmul.f32 %v1451, %v1478
      %v1507 = vmul.f32 %v1454, %v1478
      %v1508 = vmul.f32 %v1459, %v1478
      %v1509 = vmul.f32 %v1462, %v1478
      %v1510 = vmul.f32 %v1467, %v1478
      %v1511 = vmul.f32 %v1470, %v1478
      %v1512 = vld [vmem:[%s3] sm:$0x1]
      %v1514 = vlaneseq
      %v1515 = vshrl.u32 %v1514, 7
      %v1516 = vsub.s32 0, %v1515
      %v1517 = vrot.slane %v1512, %v1516
      %v1519 = vadd.f32 %v1480, %v1517
      %v1520 = vadd.f32 %v1481, %v1517
      %v1521 = vadd.f32 %v1482, %v1517
      %v1522 = vadd.f32 %v1483, %v1517
      %v1523 = vadd.f32 %v1484, %v1517
      %v1524 = vadd.f32 %v1485, %v1517
      %v1525 = vadd.f32 %v1486, %v1517
      %v1526 = vadd.f32 %v1487, %v1517
      %v1527 = vadd.f32 %v1488, %v1517
      %v1528 = vadd.f32 %v1489, %v1517
      %v1529 = vadd.f32 %v1490, %v1517
      %v1530 = vadd.f32 %v1491, %v1517
      %v1531 = vadd.f32 %v1492, %v1517
      %v1532 = vadd.f32 %v1493, %v1517
      %v1533 = vadd.f32 %v1494, %v1517
      %v1534 = vadd.f32 %v1495, %v1517
      %v1535 = vadd.f32 %v1496, %v1517
      %v1536 = vadd.f32 %v1497, %v1517
      %v1537 = vadd.f32 %v1498, %v1517
      %v1538 = vadd.f32 %v1499, %v1517
      %v1539 = vadd.f32 %v1500, %v1517
      %v1540 = vadd.f32 %v1501, %v1517
      %v1541 = vadd.f32 %v1502, %v1517
      %v1542 = vadd.f32 %v1503, %v1517
      %v1543 = vadd.f32 %v1504, %v1517
      %v1544 = vadd.f32 %v1505, %v1517
      %v1545 = vadd.f32 %v1506, %v1517
      %v1546 = vadd.f32 %v1507, %v1517
      %v1547 = vadd.f32 %v1508, %v1517
      %v1548 = vadd.f32 %v1509, %v1517
      %v1549 = vadd.f32 %v1510, %v1517
      %v1550 = vadd.f32 %v1511, %v1517
      %vm1551 = vcmp.ge.f32.partialorder %v1519, 0.0
      %vm1552 = vcmp.ge.f32.partialorder %v1520, 0.0
      %vm1553 = vcmp.ge.f32.partialorder %v1521, 0.0
      %vm1554 = vcmp.ge.f32.partialorder %v1522, 0.0
      %vm1555 = vcmp.ge.f32.partialorder %v1523, 0.0
      %vm1556 = vcmp.ge.f32.partialorder %v1524, 0.0
      %vm1557 = vcmp.ge.f32.partialorder %v1525, 0.0
      %vm1558 = vcmp.ge.f32.partialorder %v1526, 0.0
      %vm1559 = vcmp.ge.f32.partialorder %v1527, 0.0
      %vm1560 = vcmp.ge.f32.partialorder %v1528, 0.0
      %vm1561 = vcmp.ge.f32.partialorder %v1529, 0.0
      %vm1562 = vcmp.ge.f32.partialorder %v1530, 0.0
      %vm1563 = vcmp.ge.f32.partialorder %v1531, 0.0
      %vm1564 = vcmp.ge.f32.partialorder %v1532, 0.0
      %vm1565 = vcmp.ge.f32.partialorder %v1533, 0.0
      %vm1566 = vcmp.ge.f32.partialorder %v1534, 0.0
      %vm1567 = vcmp.ge.f32.partialorder %v1535, 0.0
      %vm1568 = vcmp.ge.f32.partialorder %v1536, 0.0
      %vm1569 = vcmp.ge.f32.partialorder %v1537, 0.0
      %vm1570 = vcmp.ge.f32.partialorder %v1538, 0.0
      %vm1571 = vcmp.ge.f32.partialorder %v1539, 0.0
      %vm1572 = vcmp.ge.f32.partialorder %v1540, 0.0
      %vm1573 = vcmp.ge.f32.partialorder %v1541, 0.0
      %vm1574 = vcmp.ge.f32.partialorder %v1542, 0.0
      %vm1575 = vcmp.ge.f32.partialorder %v1543, 0.0
      %vm1576 = vcmp.ge.f32.partialorder %v1544, 0.0
      %vm1577 = vcmp.ge.f32.partialorder %v1545, 0.0
      %vm1578 = vcmp.ge.f32.partialorder %v1546, 0.0
      %vm1579 = vcmp.ge.f32.partialorder %v1547, 0.0
      %vm1580 = vcmp.ge.f32.partialorder %v1548, 0.0
      %vm1581 = vcmp.ge.f32.partialorder %v1549, 0.0
      %vm1582 = vcmp.ge.f32.partialorder %v1550, 0.0
      %v1583 = vmul.f32 %v1519, 0.01
      %v1584 = vmul.f32 %v1520, 0.01
      %v1585 = vmul.f32 %v1521, 0.01
      %v1586 = vmul.f32 %v1522, 0.01
      %v1587 = vmul.f32 %v1523, 0.01
      %v1588 = vmul.f32 %v1524, 0.01
      %v1589 = vmul.f32 %v1525, 0.01
      %v1590 = vmul.f32 %v1526, 0.01
      %v1591 = vmul.f32 %v1527, 0.01
      %v1592 = vmul.f32 %v1528, 0.01
      %v1593 = vmul.f32 %v1529, 0.01
      %v1594 = vmul.f32 %v1530, 0.01
      %v1595 = vmul.f32 %v1531, 0.01
      %v1596 = vmul.f32 %v1532, 0.01
      %v1597 = vmul.f32 %v1533, 0.01
      %v1598 = vmul.f32 %v1534, 0.01
      %v1599 = vmul.f32 %v1535, 0.01
      %v1600 = vmul.f32 %v1536, 0.01
      %v1601 = vmul.f32 %v1537, 0.01
      %v1602 = vmul.f32 %v1538, 0.01
      %v1603 = vmul.f32 %v1539, 0.01
      %v1604 = vmul.f32 %v1540, 0.01
      %v1605 = vmul.f32 %v1541, 0.01
      %v1606 = vmul.f32 %v1542, 0.01
      %v1607 = vmul.f32 %v1543, 0.01
      %v1608 = vmul.f32 %v1544, 0.01
      %v1609 = vmul.f32 %v1545, 0.01
      %v1610 = vmul.f32 %v1546, 0.01
      %v1611 = vmul.f32 %v1547, 0.01
      %v1612 = vmul.f32 %v1548, 0.01
      %v1613 = vmul.f32 %v1549, 0.01
      %v1614 = vmul.f32 %v1550, 0.01
      %v1615 = vsel %vm1551, %v1519, %v1583
      %v1616 = vsel %vm1552, %v1520, %v1584
      %v1617 = vsel %vm1553, %v1521, %v1585
      %v1618 = vsel %vm1554, %v1522, %v1586
      %v1619 = vsel %vm1555, %v1523, %v1587
      %v1620 = vsel %vm1556, %v1524, %v1588
      %v1621 = vsel %vm1557, %v1525, %v1589
      %v1622 = vsel %vm1558, %v1526, %v1590
      %v1623 = vsel %vm1559, %v1527, %v1591
      %v1624 = vsel %vm1560, %v1528, %v1592
      %v1625 = vsel %vm1561, %v1529, %v1593
      %v1626 = vsel %vm1562, %v1530, %v1594
      %v1627 = vsel %vm1563, %v1531, %v1595
      %v1628 = vsel %vm1564, %v1532, %v1596
      %v1629 = vsel %vm1565, %v1533, %v1597
      %v1630 = vsel %vm1566, %v1534, %v1598
      %v1631 = vsel %vm1567, %v1535, %v1599
      %v1632 = vsel %vm1568, %v1536, %v1600
      %v1633 = vsel %vm1569, %v1537, %v1601
      %v1634 = vsel %vm1570, %v1538, %v1602
      %v1635 = vsel %vm1571, %v1539, %v1603
      %v1636 = vsel %vm1572, %v1540, %v1604
      %v1637 = vsel %vm1573, %v1541, %v1605
      %v1638 = vsel %vm1574, %v1542, %v1606
      %v1639 = vsel %vm1575, %v1543, %v1607
      %v1640 = vsel %vm1576, %v1544, %v1608
      %v1641 = vsel %vm1577, %v1545, %v1609
      %v1642 = vsel %vm1578, %v1546, %v1610
      %v1643 = vsel %vm1579, %v1547, %v1611
      %v1644 = vsel %vm1580, %v1548, %v1612
      %v1645 = vsel %vm1581, %v1549, %v1613
      %v1646 = vsel %vm1582, %v1550, %v1614
      %1647 = vst.msk [vmem:[%s220] sm:$0xff] %vm983, %v1615
      %1648 = vst.msk [vmem:[%s220 + $0x8] sm:$0xff] %vm983, %v1616
      %1649 = vst.msk [vmem:[%s220 + $0x10] sm:$0xff] %vm983, %v1617
      %1650 = vst.msk [vmem:[%s220 + $0x18] sm:$0xff] %vm983, %v1618
      %1651 = vst.msk [vmem:[%s220 + $0x20] sm:$0xff] %vm983, %v1619
      %1652 = vst.msk [vmem:[%s220 + $0x28] sm:$0xff] %vm983, %v1620
      %1653 = vst.msk [vmem:[%s220 + $0x30] sm:$0xff] %vm983, %v1621
      %1654 = vst.msk [vmem:[%s220 + $0x38] sm:$0xff] %vm983, %v1622
      %1655 = vst.msk [vmem:[%s220 + $0x40] sm:$0xff] %vm983, %v1623
      %1656 = vst.msk [vmem:[%s220 + $0x48] sm:$0xff] %vm983, %v1624
      %1657 = vst.msk [vmem:[%s220 + $0x50] sm:$0xff] %vm983, %v1625
      %1658 = vst.msk [vmem:[%s220 + $0x58] sm:$0xff] %vm983, %v1626
      %1659 = vst.msk [vmem:[%s220 + $0x60] sm:$0xff] %vm983, %v1627
      %1660 = vst.msk [vmem:[%s220 + $0x68] sm:$0xff] %vm983, %v1628
      %1661 = vst.msk [vmem:[%s220 + $0x70] sm:$0xff] %vm983, %v1629
      %1662 = vst.msk [vmem:[%s220 + $0x78] sm:$0xff] %vm983, %v1630
      %1663 = vst.msk [vmem:[%s220 + $0x80] sm:$0xff] %vm983, %v1631
      %1664 = vst.msk [vmem:[%s220 + $0x88] sm:$0xff] %vm983, %v1632
      %1665 = vst.msk [vmem:[%s220 + $0x90] sm:$0xff] %vm983, %v1633
      %1666 = vst.msk [vmem:[%s220 + $0x98] sm:$0xff] %vm983, %v1634
      %1667 = vst.msk [vmem:[%s220 + $0xa0] sm:$0xff] %vm983, %v1635
      %1668 = vst.msk [vmem:[%s220 + $0xa8] sm:$0xff] %vm983, %v1636
      %1669 = vst.msk [vmem:[%s220 + $0xb0] sm:$0xff] %vm983, %v1637
      %1670 = vst.msk [vmem:[%s220 + $0xb8] sm:$0xff] %vm983, %v1638
      %1671 = vst.msk [vmem:[%s220 + $0xc0] sm:$0xff] %vm983, %v1639
      %1672 = vst.msk [vmem:[%s220 + $0xc8] sm:$0xff] %vm983, %v1640
      %1673 = vst.msk [vmem:[%s220 + $0xd0] sm:$0xff] %vm983, %v1641
      %1674 = vst.msk [vmem:[%s220 + $0xd8] sm:$0xff] %vm983, %v1642
      %1675 = vst.msk [vmem:[%s220 + $0xe0] sm:$0xff] %vm983, %v1643
      %1676 = vst.msk [vmem:[%s220 + $0xe8] sm:$0xff] %vm983, %v1644
      %1677 = vst.msk [vmem:[%s220 + $0xf0] sm:$0xff] %vm983, %v1645
      %1678 = vst.msk [vmem:[%s220 + $0xf8] sm:$0xff] %vm983, %v1646
      %s1679 = sadd.s32 %s19, %s20
      %s1680 = smul.u32 32, %s1679
      %p1681 = scmp.lt.s32.totalorder %s1680, 63
      %s1682 = scalar_select %p1681, %s1680, 63
      %s1683 = smul.addr %s1682, 8
      %s1684 = scalar_lea.vmem %s4, %s1683
      // Predicated region
      $region37: #{conv_bn_relu.3} parent=35 // pred_check
        %p1685 = pneg %p138
      $region38: #{conv_bn_relu.3} parent=35 // pred_check_branch
        %1687 = sbr.rel (%p1685) target = $region40
      $region39: #{conv_bn_relu.3} parent=35 // pred_region
        %s1688 = sadd.s32 %s19, %s20
        %s1689 = smul.u32 32, %s1688
      $region40: #{conv_bn_relu.3} parent=35 // pred_fallthru
        _
    $region36: #{conv_bn_relu.3} parent=5 // pred_fallthru
      _
    %p1690 = scmp.le.s32.totalorder 2, %s10
    // Predicated region
    $region41: #{conv_bn_relu.3} parent=5 // pred_check
      %p1691 = pneg %p1690
    $region42: #{conv_bn_relu.3} parent=5 // pred_check_branch
      %1693 = sbr.rel (%p1691) target = $region44
    $region43: #{conv_bn_relu.3} parent=5 // pred_region
      %s1694 = ssub.s32 %s10, 2
      // Predicated region
      $region45: #{conv_bn_relu.3} parent=43 // pred_check
        %p1695 = pneg %p144
      $region46: #{conv_bn_relu.3} parent=43 // pred_check_branch
        %1697 = sbr.rel (%p1695) target = $region48
      $region47: #{conv_bn_relu.3} parent=43 // pred_region
        %s1698 = sadd.s32 %s21, %s22
        %s1699 = smul.u32 32, %s1698
        %p1700 = scmp.lt.s32.totalorder %s1699, 63
        %s1701 = scalar_select %p1700, %s1699, 63
        %s1702 = smul.addr %s1701, 8
        %s1703 = scalar_lea.vmem %s4, %s1702
      $region48: #{conv_bn_relu.3} parent=43 // pred_fallthru
        _
    $region44: #{conv_bn_relu.3} parent=5 // pred_fallthru
      _
  $region6: #{conv_bn_relu.3} parent=0 // loop_footer
    %s14 = sadd.s32 1, %s10
  $region7: #{conv_bn_relu.3} parent=0 // loop_footer_branch
    %9 = sbr.rel target = $region3
  $region8: #{conv_bn_relu.3} parent=0 // loop_exit
    _

</llo_original>
